<compile_context>
chip_gen: v7x
topology: tpu7x:2x2x1
jax: 0.10.0
libtpu: 0.0.40
codegen_flags: <defaults>
</compile_context>

<pallas_src>
import jax
import jax.numpy as jnp
from jax.experimental import pallas as pl
from jax.experimental.pallas import tpu as pltpu

ACTUAL = [768, 512, 128, 64, 32, 20, 20]      # true layer widths (input, fc1..fc6 outputs)
PADDED = [768, 512, 128, 128, 128, 128, 128]  # lane-aligned widths used in-kernel
EPS = 1e-5                                    # BatchNorm1d default
MAX_TILE_B = 512                              # ~85% of HBM roofline per measured pipelines
MIN_SINGLE_TILE_B = 64                        # below this, don't split for megacore
BATCH_ALIGN = 16                              # bf16 sublane packing


def _cdiv(a, m):
    return -(-a // m)


def _round_up(a, m):
    return _cdiv(a, m) * m


def _pad2(a, shape):
    return jnp.pad(a, [(0, s - d) for d, s in zip(a.shape, shape)])


def _choose_tiling(B):
    """Balanced batch tiling.

    >= 2 tiles whenever B is non-trivial (keeps both v7x TensorCores busy; the extra
    grid step is noise on v5e/v6e), tiles rounded to 16 rows (bf16 sublane pack),
    never padding the batch up to a full MAX_TILE_B multiple.
    """
    if B <= MIN_SINGLE_TILE_B:
        n_tiles = 1
    else:
        n_tiles = max(2, _cdiv(B, MAX_TILE_B))
    tile_b = _round_up(_cdiv(B, n_tiles), BATCH_ALIGN)
    return tile_b, tile_b * n_tiles


def _mlp_kernel(x_ref,
                w1, w2, w3, w4, w5, w6,
                b1, b2, b3, b4, b5, b6,
                o_ref):
    """Fused (BN-folded) MLP: 5 x (Linear -> ReLU) + Linear -> Sigmoid on one batch tile."""

    def layer(h, w_ref, b_ref, relu):
        # bf16 x bf16 matmul on the MXU, f32 accumulation; bias/ReLU stay f32 on the VPU.
        z = jnp.dot(h.astype(jnp.bfloat16), w_ref[...],
                    preferred_element_type=jnp.float32) + b_ref[...]
        return jnp.maximum(z, 0.0) if relu else z

    h = x_ref[...]                      # bf16 batch tile, fed straight to the MXU
    h = layer(h, w1, b1, True)
    h = layer(h, w2, b2, True)
    h = layer(h, w3, b3, True)
    h = layer(h, w4, b4, True)
    h = layer(h, w5, b5, True)
    h = layer(h, w6, b6, False)
    o_ref[...] = 0.5 * (jnp.tanh(0.5 * h) + 1.0)   # sigmoid via EUP tanh (no VPU divide)


def prepare_params(params, weights_dtype=jnp.bfloat16):
    """One-time (checkpoint-load time) prep: fold eval-mode BN into the next Linear,
    zero-pad feature dims to 128, cast weights to bf16 (biases stay f32)."""
    Ws, bs = [], []
    s_prev = t_prev = None
    for i in range(1, 7):
        W = params[f"W{i}"].astype(jnp.float32)   # (d_in, d_out), pre-transposed
        b = params[f"b{i}"].astype(jnp.float32)
        if s_prev is not None:                     # fold BN_{i-1} forward into fc_i
            Wf = s_prev[:, None] * W
            bf = t_prev @ W + b
        else:
            Wf, bf = W, b
        if i <= 5:                                 # BN_i follows relu(fc_i); fold into fc_{i+1}
            s_prev = params[f"gamma{i}"] / jnp.sqrt(params[f"var{i}"] + EPS)
            t_prev = params[f"beta{i}"] - params[f"mean{i}"] * s_prev
        Ws.append(_pad2(Wf, (PADDED[i - 1], PADDED[i])).astype(weights_dtype))
        bs.append(_pad2(bf.reshape(1, -1), (1, PADDED[i])))   # f32, padded lanes = 0
    return {"W": tuple(Ws), "b": tuple(bs)}


@jax.jit
def hv_classifier_forward(x, prepared):
    """x: (B, 768) float32 embeddings.  Returns (B, 20) sigmoid outputs."""
    B = x.shape[0]
    tile_b, B_pad = _choose_tiling(B)
    # Single fused cast+pad: x is streamed to the kernel as bf16 (halves x HBM traffic).
    x_pad = jnp.pad(x.astype(jnp.bfloat16), ((0, B_pad - B), (0, 0)))

    resident = pl.Buffered(1)   # constant index_map -> single resident VMEM buffer
    x_spec = pl.BlockSpec((tile_b, PADDED[0]), lambda i: (i, 0))
    w_specs = [pl.BlockSpec((PADDED[j], PADDED[j + 1]), lambda i: (0, 0),
                            pipeline_mode=resident) for j in range(6)]
    b_specs = [pl.BlockSpec((1, PADDED[j + 1]), lambda i: (0, 0),
                            pipeline_mode=resident) for j in range(6)]
    out_spec = pl.BlockSpec((tile_b, PADDED[6]), lambda i: (i, 0))

    out = pl.pallas_call(
        _mlp_kernel,
        grid=(B_pad // tile_b,),
        in_specs=[x_spec] + w_specs + b_specs,
        out_specs=out_spec,
        out_shape=jax.ShapeDtypeStruct((B_pad, PADDED[6]), jnp.float32),
        compiler_params=pltpu.CompilerParams(dimension_semantics=("parallel",)),
    )(x_pad, *prepared["W"], *prepared["b"])
    return out[:B, :ACTUAL[6]]


def reference_prepared(x, prepared):
    """Plain-JAX mirror of the exact kernel math (folded BN, bf16 x/weights, f32 accum,
    tanh-based sigmoid)."""
    h = x.astype(jnp.bfloat16)
    for li in range(6):
        h = jnp.dot(h.astype(jnp.bfloat16), prepared["W"][li],
                    preferred_element_type=jnp.float32) + prepared["b"][li]
        if li < 5:
            h = jnp.maximum(h, 0.0)
    return (0.5 * (jnp.tanh(0.5 * h) + 1.0))[:, :ACTUAL[6]]


def reference_forward(x, params):
    """Plain-JAX f32 reference matching the PyTorch forward (eval-mode BN/dropout)."""
    h = x.astype(jnp.float32)
    for i in range(1, 6):
        h = jnp.maximum(h @ params[f"W{i}"] + params[f"b{i}"], 0.0)
        scale = params[f"gamma{i}"] / jnp.sqrt(params[f"var{i}"] + EPS)
        shift = params[f"beta{i}"] - params[f"mean{i}"] * scale
        h = h * scale + shift
    h = h @ params["W6"] + params["b6"]
    return jax.nn.sigmoid(h)


def init_params(key):
    params = {}
    for i in range(1, 7):
        din, dout = ACTUAL[i - 1], ACTUAL[i]
        key, kw, kb = jax.random.split(key, 3)
        params[f"W{i}"] = 0.05 * jax.random.normal(kw, (din, dout), jnp.float32)
        params[f"b{i}"] = 0.05 * jax.random.normal(kb, (dout,), jnp.float32)
        if i <= 5:
            key, kg, kbt, km, kv = jax.random.split(key, 5)
            params[f"gamma{i}"] = 1.0 + 0.1 * jax.random.normal(kg, (dout,), jnp.float32)
            params[f"beta{i}"] = 0.1 * jax.random.normal(kbt, (dout,), jnp.float32)
            params[f"mean{i}"] = 0.05 * jax.random.normal(km, (dout,), jnp.float32)
            params[f"var{i}"] = 0.5 + jnp.abs(jax.random.normal(kv, (dout,), jnp.float32))
    return params


if __name__ == "__main__":
    # TODO(synk): the SentenceTransformer encoder used in `predict` is out of scope;
    # the kernel implements `forward` on precomputed 768-d embeddings.
    key = jax.random.PRNGKey(0)
    key, kx1, kx2 = jax.random.split(key, 3)
    params = init_params(key)
    prepared = prepare_params(params)          # one-time prep (fold BN, pad, bf16)

    # Small batch (single 16-row tile) — matches the module's typical inference use.
    B1 = 8
    x1 = jax.random.normal(kx1, (B1, 768), jnp.float32)
    out1 = jax.block_until_ready(hv_classifier_forward(x1, prepared))
    assert out1.shape == (B1, 20), out1.shape
    ref1 = reference_prepared(x1, prepared)          # exact mirror of kernel math
    ref1_f32 = reference_forward(x1, params)         # original f32 PyTorch semantics
    assert jnp.allclose(out1, ref1, atol=5e-4, rtol=5e-4), float(jnp.max(jnp.abs(out1 - ref1)))
    assert jnp.allclose(out1, ref1_f32, atol=5e-2, rtol=5e-2), float(jnp.max(jnp.abs(out1 - ref1_f32)))

    # Larger batch exercises the balanced multi-tile grid (2 x 160, padded tail rows).
    B2 = 300
    x2 = jax.random.normal(kx2, (B2, 768), jnp.float32)
    out2 = jax.block_until_ready(hv_classifier_forward(x2, prepared))
    ref2 = reference_prepared(x2, prepared)
    assert out2.shape == (B2, 20), out2.shape
    assert jnp.allclose(out2, ref2, atol=5e-4, rtol=5e-4), float(jnp.max(jnp.abs(out2 - ref2)))

    print("KERNEL_OK")
</pallas_src>

<mosaic_0001>
module attributes {stable_mosaic.version = 11 : i64} {
  func.func @_mlp_kernel(%arg0: i32, %arg1: memref<16x768xbf16, #tpu.memory_space<vmem>>, %arg2: memref<768x512xbf16, #tpu.memory_space<vmem>>, %arg3: memref<512x128xbf16, #tpu.memory_space<vmem>>, %arg4: memref<128x128xbf16, #tpu.memory_space<vmem>>, %arg5: memref<128x128xbf16, #tpu.memory_space<vmem>>, %arg6: memref<128x128xbf16, #tpu.memory_space<vmem>>, %arg7: memref<128x128xbf16, #tpu.memory_space<vmem>>, %arg8: memref<1x512xf32, #tpu.memory_space<vmem>>, %arg9: memref<1x128xf32, #tpu.memory_space<vmem>>, %arg10: memref<1x128xf32, #tpu.memory_space<vmem>>, %arg11: memref<1x128xf32, #tpu.memory_space<vmem>>, %arg12: memref<1x128xf32, #tpu.memory_space<vmem>>, %arg13: memref<1x128xf32, #tpu.memory_space<vmem>>, %arg14: memref<16x128xf32, #tpu.memory_space<vmem>>) attributes {dimension_semantics = [#tpu.dimension_semantics<parallel>], iteration_bounds = array<i64: 1>, scalar_prefetch = 0 : i64, scratch_operands = 0 : i64, tpu.core_type = #tpu.core_type<tc>, window_params = [{transform_indices = @transform_0, window_bounds = array<i64: 16, 768>}, {pipeline_mode = #tpu.pipeline_mode<synchronous>, transform_indices = @transform_1, window_bounds = array<i64: 768, 512>}, {pipeline_mode = #tpu.pipeline_mode<synchronous>, transform_indices = @transform_2, window_bounds = array<i64: 512, 128>}, {pipeline_mode = #tpu.pipeline_mode<synchronous>, transform_indices = @transform_3, window_bounds = array<i64: 128, 128>}, {pipeline_mode = #tpu.pipeline_mode<synchronous>, transform_indices = @transform_4, window_bounds = array<i64: 128, 128>}, {pipeline_mode = #tpu.pipeline_mode<synchronous>, transform_indices = @transform_5, window_bounds = array<i64: 128, 128>}, {pipeline_mode = #tpu.pipeline_mode<synchronous>, transform_indices = @transform_6, window_bounds = array<i64: 128, 128>}, {pipeline_mode = #tpu.pipeline_mode<synchronous>, transform_indices = @transform_7, window_bounds = array<i64: 1, 512>}, {pipeline_mode = #tpu.pipeline_mode<synchronous>, transform_indices = @transform_8, window_bounds = array<i64: 1, 128>}, {pipeline_mode = #tpu.pipeline_mode<synchronous>, transform_indices = @transform_9, window_bounds = array<i64: 1, 128>}, {pipeline_mode = #tpu.pipeline_mode<synchronous>, transform_indices = @transform_10, window_bounds = array<i64: 1, 128>}, {pipeline_mode = #tpu.pipeline_mode<synchronous>, transform_indices = @transform_11, window_bounds = array<i64: 1, 128>}, {pipeline_mode = #tpu.pipeline_mode<synchronous>, transform_indices = @transform_12, window_bounds = array<i64: 1, 128>}, {transform_indices = @transform_13, window_bounds = array<i64: 16, 128>}]} {
    %c0 = arith.constant 0 : index
    %c0_0 = arith.constant 0 : index
    %0 = vector.load %arg1[%c0, %c0_0] : memref<16x768xbf16, #tpu.memory_space<vmem>>, vector<16x768xbf16>
    %c0_1 = arith.constant 0 : index
    %c0_2 = arith.constant 0 : index
    %1 = vector.load %arg2[%c0_1, %c0_2] : memref<768x512xbf16, #tpu.memory_space<vmem>>, vector<768x512xbf16>
    %cst = arith.constant dense<0.000000e+00> : vector<16x512xf32>
    %2 = tpu.matmul %0, %1, %cst {dimension_numbers = #tpu.dot_dimension_numbers<[1], [0], [0], [1], [0, 0, 1, 1], [], []>} : vector<16x768xbf16>, vector<768x512xbf16>, vector<16x512xf32> -> vector<16x512xf32>
    %c0_3 = arith.constant 0 : index
    %c0_4 = arith.constant 0 : index
    %3 = vector.load %arg8[%c0_3, %c0_4] : memref<1x512xf32, #tpu.memory_space<vmem>>, vector<1x512xf32>
    %4 = vector.broadcast %3 : vector<1x512xf32> to vector<16x512xf32>
    %5 = arith.addf %2, %4 : vector<16x512xf32>
    %cst_5 = arith.constant 0.000000e+00 : f32
    %6 = vector.broadcast %cst_5 : f32 to vector<16x512xf32>
    %7 = arith.maximumf %5, %6 : vector<16x512xf32>
    %8 = arith.truncf %7 : vector<16x512xf32> to vector<16x512xbf16>
    %c0_6 = arith.constant 0 : index
    %c0_7 = arith.constant 0 : index
    %9 = vector.load %arg3[%c0_6, %c0_7] : memref<512x128xbf16, #tpu.memory_space<vmem>>, vector<512x128xbf16>
    %cst_8 = arith.constant dense<0.000000e+00> : vector<16x128xf32>
    %10 = tpu.matmul %8, %9, %cst_8 {dimension_numbers = #tpu.dot_dimension_numbers<[1], [0], [0], [1], [0, 0, 1, 1], [], []>} : vector<16x512xbf16>, vector<512x128xbf16>, vector<16x128xf32> -> vector<16x128xf32>
    %c0_9 = arith.constant 0 : index
    %c0_10 = arith.constant 0 : index
    %11 = vector.load %arg9[%c0_9, %c0_10] : memref<1x128xf32, #tpu.memory_space<vmem>>, vector<1x128xf32>
    %12 = vector.broadcast %11 : vector<1x128xf32> to vector<16x128xf32>
    %13 = arith.addf %10, %12 : vector<16x128xf32>
    %cst_11 = arith.constant 0.000000e+00 : f32
    %14 = vector.broadcast %cst_11 : f32 to vector<16x128xf32>
    %15 = arith.maximumf %13, %14 : vector<16x128xf32>
    %16 = arith.truncf %15 : vector<16x128xf32> to vector<16x128xbf16>
    %c0_12 = arith.constant 0 : index
    %c0_13 = arith.constant 0 : index
    %17 = vector.load %arg4[%c0_12, %c0_13] : memref<128x128xbf16, #tpu.memory_space<vmem>>, vector<128x128xbf16>
    %cst_14 = arith.constant dense<0.000000e+00> : vector<16x128xf32>
    %18 = tpu.matmul %16, %17, %cst_14 {dimension_numbers = #tpu.dot_dimension_numbers<[1], [0], [0], [1], [0, 0, 1, 1], [], []>} : vector<16x128xbf16>, vector<128x128xbf16>, vector<16x128xf32> -> vector<16x128xf32>
    %c0_15 = arith.constant 0 : index
    %c0_16 = arith.constant 0 : index
    %19 = vector.load %arg10[%c0_15, %c0_16] : memref<1x128xf32, #tpu.memory_space<vmem>>, vector<1x128xf32>
    %20 = vector.broadcast %19 : vector<1x128xf32> to vector<16x128xf32>
    %21 = arith.addf %18, %20 : vector<16x128xf32>
    %cst_17 = arith.constant 0.000000e+00 : f32
    %22 = vector.broadcast %cst_17 : f32 to vector<16x128xf32>
    %23 = arith.maximumf %21, %22 : vector<16x128xf32>
    %24 = arith.truncf %23 : vector<16x128xf32> to vector<16x128xbf16>
    %c0_18 = arith.constant 0 : index
    %c0_19 = arith.constant 0 : index
    %25 = vector.load %arg5[%c0_18, %c0_19] : memref<128x128xbf16, #tpu.memory_space<vmem>>, vector<128x128xbf16>
    %cst_20 = arith.constant dense<0.000000e+00> : vector<16x128xf32>
    %26 = tpu.matmul %24, %25, %cst_20 {dimension_numbers = #tpu.dot_dimension_numbers<[1], [0], [0], [1], [0, 0, 1, 1], [], []>} : vector<16x128xbf16>, vector<128x128xbf16>, vector<16x128xf32> -> vector<16x128xf32>
    %c0_21 = arith.constant 0 : index
    %c0_22 = arith.constant 0 : index
    %27 = vector.load %arg11[%c0_21, %c0_22] : memref<1x128xf32, #tpu.memory_space<vmem>>, vector<1x128xf32>
    %28 = vector.broadcast %27 : vector<1x128xf32> to vector<16x128xf32>
    %29 = arith.addf %26, %28 : vector<16x128xf32>
    %cst_23 = arith.constant 0.000000e+00 : f32
    %30 = vector.broadcast %cst_23 : f32 to vector<16x128xf32>
    %31 = arith.maximumf %29, %30 : vector<16x128xf32>
    %32 = arith.truncf %31 : vector<16x128xf32> to vector<16x128xbf16>
    %c0_24 = arith.constant 0 : index
    %c0_25 = arith.constant 0 : index
    %33 = vector.load %arg6[%c0_24, %c0_25] : memref<128x128xbf16, #tpu.memory_space<vmem>>, vector<128x128xbf16>
    %cst_26 = arith.constant dense<0.000000e+00> : vector<16x128xf32>
    %34 = tpu.matmul %32, %33, %cst_26 {dimension_numbers = #tpu.dot_dimension_numbers<[1], [0], [0], [1], [0, 0, 1, 1], [], []>} : vector<16x128xbf16>, vector<128x128xbf16>, vector<16x128xf32> -> vector<16x128xf32>
    %c0_27 = arith.constant 0 : index
    %c0_28 = arith.constant 0 : index
    %35 = vector.load %arg12[%c0_27, %c0_28] : memref<1x128xf32, #tpu.memory_space<vmem>>, vector<1x128xf32>
    %36 = vector.broadcast %35 : vector<1x128xf32> to vector<16x128xf32>
    %37 = arith.addf %34, %36 : vector<16x128xf32>
    %cst_29 = arith.constant 0.000000e+00 : f32
    %38 = vector.broadcast %cst_29 : f32 to vector<16x128xf32>
    %39 = arith.maximumf %37, %38 : vector<16x128xf32>
    %40 = arith.truncf %39 : vector<16x128xf32> to vector<16x128xbf16>
    %c0_30 = arith.constant 0 : index
    %c0_31 = arith.constant 0 : index
    %41 = vector.load %arg7[%c0_30, %c0_31] : memref<128x128xbf16, #tpu.memory_space<vmem>>, vector<128x128xbf16>
    %cst_32 = arith.constant dense<0.000000e+00> : vector<16x128xf32>
    %42 = tpu.matmul %40, %41, %cst_32 {dimension_numbers = #tpu.dot_dimension_numbers<[1], [0], [0], [1], [0, 0, 1, 1], [], []>} : vector<16x128xbf16>, vector<128x128xbf16>, vector<16x128xf32> -> vector<16x128xf32>
    %c0_33 = arith.constant 0 : index
    %c0_34 = arith.constant 0 : index
    %43 = vector.load %arg13[%c0_33, %c0_34] : memref<1x128xf32, #tpu.memory_space<vmem>>, vector<1x128xf32>
    %44 = vector.broadcast %43 : vector<1x128xf32> to vector<16x128xf32>
    %45 = arith.addf %42, %44 : vector<16x128xf32>
    %cst_35 = arith.constant 5.000000e-01 : f32
    %46 = vector.broadcast %cst_35 : f32 to vector<16x128xf32>
    %47 = arith.mulf %46, %45 : vector<16x128xf32>
    %48 = math.tanh %47 : vector<16x128xf32>
    %cst_36 = arith.constant 1.000000e+00 : f32
    %49 = vector.broadcast %cst_36 : f32 to vector<16x128xf32>
    %50 = arith.addf %48, %49 : vector<16x128xf32>
    %cst_37 = arith.constant 5.000000e-01 : f32
    %51 = vector.broadcast %cst_37 : f32 to vector<16x128xf32>
    %52 = arith.mulf %51, %50 : vector<16x128xf32>
    %c0_38 = arith.constant 0 : index
    %c0_39 = arith.constant 0 : index
    %53 = vector.load %arg14[%c0_38, %c0_39] : memref<16x128xf32, #tpu.memory_space<vmem>>, vector<16x128xf32>
    tpu.vector_store %arg14[%c0_38, %c0_39], %52 {strides = array<i32>} : memref<16x128xf32, #tpu.memory_space<vmem>>, vector<16x128xf32>,
    return
  }
  func.func @transform_0(%arg0: i32) -> (i32, i32) {
    %c0_i32 = arith.constant 0 : i32
    %c0_i32_0 = arith.constant 0 : i32
    return %arg0, %c0_i32 : i32, i32
  }
  func.func @transform_1(%arg0: i32) -> (i32, i32) {
    %c0_i32 = arith.constant 0 : i32
    %c0_i32_0 = arith.constant 0 : i32
    %c0_i32_1 = arith.constant 0 : i32
    return %c0_i32, %c0_i32_0 : i32, i32
  }
  func.func @transform_2(%arg0: i32) -> (i32, i32) {
    %c0_i32 = arith.constant 0 : i32
    %c0_i32_0 = arith.constant 0 : i32
    %c0_i32_1 = arith.constant 0 : i32
    return %c0_i32, %c0_i32_0 : i32, i32
  }
  func.func @transform_3(%arg0: i32) -> (i32, i32) {
    %c0_i32 = arith.constant 0 : i32
    %c0_i32_0 = arith.constant 0 : i32
    %c0_i32_1 = arith.constant 0 : i32
    return %c0_i32, %c0_i32_0 : i32, i32
  }
  func.func @transform_4(%arg0: i32) -> (i32, i32) {
    %c0_i32 = arith.constant 0 : i32
    %c0_i32_0 = arith.constant 0 : i32
    %c0_i32_1 = arith.constant 0 : i32
    return %c0_i32, %c0_i32_0 : i32, i32
  }
  func.func @transform_5(%arg0: i32) -> (i32, i32) {
    %c0_i32 = arith.constant 0 : i32
    %c0_i32_0 = arith.constant 0 : i32
    %c0_i32_1 = arith.constant 0 : i32
    return %c0_i32, %c0_i32_0 : i32, i32
  }
  func.func @transform_6(%arg0: i32) -> (i32, i32) {
    %c0_i32 = arith.constant 0 : i32
    %c0_i32_0 = arith.constant 0 : i32
    %c0_i32_1 = arith.constant 0 : i32
    return %c0_i32, %c0_i32_0 : i32, i32
  }
  func.func @transform_7(%arg0: i32) -> (i32, i32) {
    %c0_i32 = arith.constant 0 : i32
    %c0_i32_0 = arith.constant 0 : i32
    %c0_i32_1 = arith.constant 0 : i32
    return %c0_i32, %c0_i32_0 : i32, i32
  }
  func.func @transform_8(%arg0: i32) -> (i32, i32) {
    %c0_i32 = arith.constant 0 : i32
    %c0_i32_0 = arith.constant 0 : i32
    %c0_i32_1 = arith.constant 0 : i32
    return %c0_i32, %c0_i32_0 : i32, i32
  }
  func.func @transform_9(%arg0: i32) -> (i32, i32) {
    %c0_i32 = arith.constant 0 : i32
    %c0_i32_0 = arith.constant 0 : i32
    %c0_i32_1 = arith.constant 0 : i32
    return %c0_i32, %c0_i32_0 : i32, i32
  }
  func.func @transform_10(%arg0: i32) -> (i32, i32) {
    %c0_i32 = arith.constant 0 : i32
    %c0_i32_0 = arith.constant 0 : i32
    %c0_i32_1 = arith.constant 0 : i32
    return %c0_i32, %c0_i32_0 : i32, i32
  }
  func.func @transform_11(%arg0: i32) -> (i32, i32) {
    %c0_i32 = arith.constant 0 : i32
    %c0_i32_0 = arith.constant 0 : i32
    %c0_i32_1 = arith.constant 0 : i32
    return %c0_i32, %c0_i32_0 : i32, i32
  }
  func.func @transform_12(%arg0: i32) -> (i32, i32) {
    %c0_i32 = arith.constant 0 : i32
    %c0_i32_0 = arith.constant 0 : i32
    %c0_i32_1 = arith.constant 0 : i32
    return %c0_i32, %c0_i32_0 : i32, i32
  }
  func.func @transform_13(%arg0: i32) -> (i32, i32) {
    %c0_i32 = arith.constant 0 : i32
    %c0_i32_0 = arith.constant 0 : i32
    return %arg0, %c0_i32 : i32, i32
  }
}

</mosaic_0001>

<llo_original>
// kernel: hv_classifier_forward.1
$region0: #{hv_classifier_forward.1}
  #allocation0 [shape = 'u32[]', space=smem, size = 0x4, offset = 0x4, fixed_abs, tag = 'smem constant byte address 0x4 - core index']
  #allocation1 [shape = 'u32[144,128]{1,0:T(1,128)}', space=vmem, size = 0x12000, scoped, tag = 'internal scratch']
  %s0 = inlined_call_operand.vmem [shape: bf16[16,768], index: 0, kind: input, shape index: {}]
  %s1 = inlined_call_operand.hbm [shape: bf16[768,512], index: 1, kind: input, shape index: {}]
  %s2 = inlined_call_operand.hbm [shape: bf16[512,128], index: 2, kind: input, shape index: {}]
  %s3 = inlined_call_operand.vmem [shape: bf16[128,128], index: 3, kind: input, shape index: {}]
  %s4 = inlined_call_operand.vmem [shape: bf16[128,128], index: 4, kind: input, shape index: {}]
  %s5 = inlined_call_operand.hbm [shape: bf16[128,128], index: 5, kind: input, shape index: {}]
  %s6 = inlined_call_operand.hbm [shape: bf16[128,128], index: 6, kind: input, shape index: {}]
  %s7 = inlined_call_operand.vmem [shape: f32[1,512], index: 7, kind: input, shape index: {}]
  %s8 = inlined_call_operand.vmem [shape: f32[1,128], index: 8, kind: input, shape index: {}]
  %s9 = inlined_call_operand.vmem [shape: f32[1,128], index: 9, kind: input, shape index: {}]
  %s10 = inlined_call_operand.vmem [shape: f32[1,128], index: 10, kind: input, shape index: {}]
  %s11 = inlined_call_operand.vmem [shape: f32[1,128], index: 11, kind: input, shape index: {}]
  %s12 = inlined_call_operand.vmem [shape: f32[1,128], index: 12, kind: input, shape index: {}]
  %s13 = inlined_call_operand.vmem [shape: f32[16,128], index: 13, kind: output, shape index: {}]
  %s14 = sld [smem:[#allocation0]]
  $region78: #{hv_classifier_forward.1} parent=0
    _
  %s16 = ssub.s32 1, %s14
  %s17 = scalar_select 0, %s16, %s14
  $region1: #{hv_classifier_forward.1} parent=0
    #allocation2 [shape = 'u8[786432]{0}', space=vmem, size = 0xc0000, scoped, tag = 'input window, operand 1, single buffered']
    #allocation3 [shape = 's32[1]{0}', space=sflag, size = 0x4, scoped, tag = 'scoped memory for hv_classifier_forward.1']
    #allocation4 [shape = 'u8[131072]{0}', space=vmem, size = 0x20000, scoped, tag = 'input window, operand 2, single buffered']
    #allocation5 [shape = 's32[1]{0}', space=sflag, size = 0x4, scoped, tag = 'scoped memory for hv_classifier_forward.1']
    #allocation6 [shape = 'u8[32768]{0}', space=vmem, size = 0x8000, scoped, tag = 'input window, operand 5, single buffered']
    #allocation7 [shape = 'u8[32768]{0}', space=vmem, size = 0x8000, scoped, tag = 'input window, operand 6, single buffered']
    #allocation8 [shape = 's32[1]{0}', space=sflag, size = 0x4, scoped, tag = 'scoped memory for hv_classifier_forward.1']
    %18 = vsyncpa [#allocation3], 0
    %19 = vsyncpa [#allocation5], 0
    %20 = vsyncpa [#allocation8], 0
    // Predicated region
    $region2: #{hv_classifier_forward.1} parent=1 // pred_check
      _
    $region3: #{hv_classifier_forward.1} parent=1 // pred_check_branch
      %22 = sbr.rel (0) target = $region5
    $region4: #{hv_classifier_forward.1} parent=1 // pred_region
      _
    $region5: #{hv_classifier_forward.1} parent=1 // pred_fallthru
      _
    // Predicated region
    $region6: #{hv_classifier_forward.1} parent=1 // pred_check
      _
    $region7: #{hv_classifier_forward.1} parent=1 // pred_check_branch
      %24 = sbr.rel (0) target = $region9
    $region8: #{hv_classifier_forward.1} parent=1 // pred_region
      %s26 = ssub.s32 24576, 24576
      %27 = vsyncadd [#allocation3], %s26
      %s28 = sshll.u32 [#allocation2], 4
      %s29 = int_to_ptr.vmem [resolvable:$true] %s28
      %34 = dma.hbm_to_vmem [thread:$0]  %s1, 24576, %s29, [#allocation3], 256, 256, 16
    $region9: #{hv_classifier_forward.1} parent=1 // pred_fallthru
      _
    // Predicated region
    $region10: #{hv_classifier_forward.1} parent=1 // pred_check
      _
    $region11: #{hv_classifier_forward.1} parent=1 // pred_check_branch
      %36 = sbr.rel (0) target = $region13
    $region12: #{hv_classifier_forward.1} parent=1 // pred_region
      %s38 = ssub.s32 4096, 4096
      %39 = vsyncadd [#allocation5], %s38
      %s40 = sshll.u32 [#allocation4], 4
      %s41 = int_to_ptr.vmem [resolvable:$true] %s40
      %46 = dma.hbm_to_vmem [thread:$0]  %s2, 4096, %s41, [#allocation5], 64, 64, 4
    $region13: #{hv_classifier_forward.1} parent=1 // pred_fallthru
      _
    // Predicated region
    $region14: #{hv_classifier_forward.1} parent=1 // pred_check
      _
    $region15: #{hv_classifier_forward.1} parent=1 // pred_check_branch
      %48 = sbr.rel (0) target = $region17
    $region16: #{hv_classifier_forward.1} parent=1 // pred_region
      _
    $region17: #{hv_classifier_forward.1} parent=1 // pred_fallthru
      _
    // Predicated region
    $region18: #{hv_classifier_forward.1} parent=1 // pred_check
      _
    $region19: #{hv_classifier_forward.1} parent=1 // pred_check_branch
      %50 = sbr.rel (0) target = $region21
    $region20: #{hv_classifier_forward.1} parent=1 // pred_region
      _
    $region21: #{hv_classifier_forward.1} parent=1 // pred_fallthru
      _
    // Predicated region
    $region22: #{hv_classifier_forward.1} parent=1 // pred_check
      _
    $region23: #{hv_classifier_forward.1} parent=1 // pred_check_branch
      %52 = sbr.rel (0) target = $region25
    $region24: #{hv_classifier_forward.1} parent=1 // pred_region
      %s54 = ssub.s32 1024, 1024
      %55 = vsyncadd [#allocation5], %s54
      %s56 = sshll.u32 [#allocation6], 4
      %s57 = int_to_ptr.vmem [resolvable:$true] %s56
      %62 = dma.hbm_to_vmem [thread:$0]  %s5, 1024, %s57, [#allocation5], 64, 64, 4
    $region25: #{hv_classifier_forward.1} parent=1 // pred_fallthru
      _
    // Predicated region
    $region26: #{hv_classifier_forward.1} parent=1 // pred_check
      _
    $region27: #{hv_classifier_forward.1} parent=1 // pred_check_branch
      %64 = sbr.rel (0) target = $region29
    $region28: #{hv_classifier_forward.1} parent=1 // pred_region
      %s66 = ssub.s32 1024, 1024
      %67 = vsyncadd [#allocation8], %s66
      %s68 = sshll.u32 [#allocation7], 4
      %s69 = int_to_ptr.vmem [resolvable:$true] %s68
      %74 = dma.hbm_to_vmem [thread:$0]  %s6, 1024, %s69, [#allocation8], 64, 64, 4
    $region29: #{hv_classifier_forward.1} parent=1 // pred_fallthru
      _
    // Predicated region
    $region30: #{hv_classifier_forward.1} parent=1 // pred_check
      _
    $region31: #{hv_classifier_forward.1} parent=1 // pred_check_branch
      %76 = sbr.rel (0) target = $region33
    $region32: #{hv_classifier_forward.1} parent=1 // pred_region
      _
    $region33: #{hv_classifier_forward.1} parent=1 // pred_fallthru
      _
    // Predicated region
    $region34: #{hv_classifier_forward.1} parent=1 // pred_check
      _
    $region35: #{hv_classifier_forward.1} parent=1 // pred_check_branch
      %78 = sbr.rel (0) target = $region37
    $region36: #{hv_classifier_forward.1} parent=1 // pred_region
      _
    $region37: #{hv_classifier_forward.1} parent=1 // pred_fallthru
      _
    // Predicated region
    $region38: #{hv_classifier_forward.1} parent=1 // pred_check
      _
    $region39: #{hv_classifier_forward.1} parent=1 // pred_check_branch
      %80 = sbr.rel (0) target = $region41
    $region40: #{hv_classifier_forward.1} parent=1 // pred_region
      _
    $region41: #{hv_classifier_forward.1} parent=1 // pred_fallthru
      _
    // Predicated region
    $region42: #{hv_classifier_forward.1} parent=1 // pred_check
      _
    $region43: #{hv_classifier_forward.1} parent=1 // pred_check_branch
      %82 = sbr.rel (0) target = $region45
    $region44: #{hv_classifier_forward.1} parent=1 // pred_region
      _
    $region45: #{hv_classifier_forward.1} parent=1 // pred_fallthru
      _
    // Predicated region
    $region46: #{hv_classifier_forward.1} parent=1 // pred_check
      _
    $region47: #{hv_classifier_forward.1} parent=1 // pred_check_branch
      %84 = sbr.rel (0) target = $region49
    $region48: #{hv_classifier_forward.1} parent=1 // pred_region
      _
    $region49: #{hv_classifier_forward.1} parent=1 // pred_fallthru
      _
    // Predicated region
    $region50: #{hv_classifier_forward.1} parent=1 // pred_check
      _
    $region51: #{hv_classifier_forward.1} parent=1 // pred_check_branch
      %86 = sbr.rel (0) target = $region53
    $region52: #{hv_classifier_forward.1} parent=1 // pred_region
      _
    $region53: #{hv_classifier_forward.1} parent=1 // pred_fallthru
      _
    // Predicated region
    $region54: #{hv_classifier_forward.1} parent=1 // pred_check
      _
    $region55: #{hv_classifier_forward.1} parent=1 // pred_check_branch
      %88 = sbr.rel (0) target = $region57
    $region56: #{hv_classifier_forward.1} parent=1 // pred_region
      %89 = dma.done [#allocation3], 24576
    $region57: #{hv_classifier_forward.1} parent=1 // pred_fallthru
      _
    // Predicated region
    $region58: #{hv_classifier_forward.1} parent=1 // pred_check
      _
    $region59: #{hv_classifier_forward.1} parent=1 // pred_check_branch
      %91 = sbr.rel (0) target = $region61
    $region60: #{hv_classifier_forward.1} parent=1 // pred_region
      %92 = dma.done [#allocation5], 4096
    $region61: #{hv_classifier_forward.1} parent=1 // pred_fallthru
      _
    // Predicated region
    $region62: #{hv_classifier_forward.1} parent=1 // pred_check
      _
    $region63: #{hv_classifier_forward.1} parent=1 // pred_check_branch
      %94 = sbr.rel (0) target = $region65
    $region64: #{hv_classifier_forward.1} parent=1 // pred_region
      %95 = dma.done [#allocation5], 1024
    $region65: #{hv_classifier_forward.1} parent=1 // pred_fallthru
      _
    // Predicated region
    $region66: #{hv_classifier_forward.1} parent=1 // pred_check
      _
    $region67: #{hv_classifier_forward.1} parent=1 // pred_check_branch
      %97 = sbr.rel (0) target = $region69
    $region68: #{hv_classifier_forward.1} parent=1 // pred_region
      %98 = dma.done [#allocation8], 1024
    $region69: #{hv_classifier_forward.1} parent=1 // pred_fallthru
      _
    %v100 = vld [vmem:[%s0] sm:$0xff]
    %v101 = vld [vmem:[%s0 + $0x8] sm:$0xff]
    %v102 = vld [vmem:[%s0 + $0x10] sm:$0xff]
    %v103 = vld [vmem:[%s0 + $0x18] sm:$0xff]
    %v104 = vld [vmem:[%s0 + $0x20] sm:$0xff]
    %v105 = vld [vmem:[%s0 + $0x28] sm:$0xff]
    %v106 = vld [vmem:[#allocation2] sm:$0xff]
    %v107 = vld [vmem:[#allocation2 + $0x8] sm:$0xff]
    %v108 = vld [vmem:[#allocation2 + $0x10] sm:$0xff]
    %v109 = vld [vmem:[#allocation2 + $0x18] sm:$0xff]
    %v110 = vld [vmem:[#allocation2 + $0x20] sm:$0xff]
    %v111 = vld [vmem:[#allocation2 + $0x28] sm:$0xff]
    %v112 = vld [vmem:[#allocation2 + $0x30] sm:$0xff]
    %v113 = vld [vmem:[#allocation2 + $0x38] sm:$0xff]
    %v114 = vld [vmem:[#allocation2 + $0x40] sm:$0xff]
    %v115 = vld [vmem:[#allocation2 + $0x48] sm:$0xff]
    %v116 = vld [vmem:[#allocation2 + $0x50] sm:$0xff]
    %v117 = vld [vmem:[#allocation2 + $0x58] sm:$0xff]
    %v118 = vld [vmem:[#allocation2 + $0x60] sm:$0xff]
    %v119 = vld [vmem:[#allocation2 + $0x68] sm:$0xff]
    %v120 = vld [vmem:[#allocation2 + $0x70] sm:$0xff]
    %v121 = vld [vmem:[#allocation2 + $0x78] sm:$0xff]
    %v122 = vld [vmem:[#allocation2 + $0x80] sm:$0xff]
    %v123 = vld [vmem:[#allocation2 + $0x88] sm:$0xff]
    %v124 = vld [vmem:[#allocation2 + $0x90] sm:$0xff]
    %v125 = vld [vmem:[#allocation2 + $0x98] sm:$0xff]
    %v126 = vld [vmem:[#allocation2 + $0xa0] sm:$0xff]
    %v127 = vld [vmem:[#allocation2 + $0xa8] sm:$0xff]
    %v128 = vld [vmem:[#allocation2 + $0xb0] sm:$0xff]
    %v129 = vld [vmem:[#allocation2 + $0xb8] sm:$0xff]
    %v130 = vld [vmem:[#allocation2 + $0xc0] sm:$0xff]
    %v131 = vld [vmem:[#allocation2 + $0xc8] sm:$0xff]
    %v132 = vld [vmem:[#allocation2 + $0xd0] sm:$0xff]
    %v133 = vld [vmem:[#allocation2 + $0xd8] sm:$0xff]
    %v134 = vld [vmem:[#allocation2 + $0xe0] sm:$0xff]
    %v135 = vld [vmem:[#allocation2 + $0xe8] sm:$0xff]
    %v136 = vld [vmem:[#allocation2 + $0xf0] sm:$0xff]
    %v137 = vld [vmem:[#allocation2 + $0xf8] sm:$0xff]
    %v138 = vld [vmem:[#allocation2 + $0x100] sm:$0xff]
    %v139 = vld [vmem:[#allocation2 + $0x108] sm:$0xff]
    %v140 = vld [vmem:[#allocation2 + $0x110] sm:$0xff]
    %v141 = vld [vmem:[#allocation2 + $0x118] sm:$0xff]
    %v142 = vld [vmem:[#allocation2 + $0x120] sm:$0xff]
    %v143 = vld [vmem:[#allocation2 + $0x128] sm:$0xff]
    %v144 = vld [vmem:[#allocation2 + $0x130] sm:$0xff]
    %v145 = vld [vmem:[#allocation2 + $0x138] sm:$0xff]
    %v146 = vld [vmem:[#allocation2 + $0x140] sm:$0xff]
    %v147 = vld [vmem:[#allocation2 + $0x148] sm:$0xff]
    %v148 = vld [vmem:[#allocation2 + $0x150] sm:$0xff]
    %v149 = vld [vmem:[#allocation2 + $0x158] sm:$0xff]
    %v150 = vld [vmem:[#allocation2 + $0x160] sm:$0xff]
    %v151 = vld [vmem:[#allocation2 + $0x168] sm:$0xff]
    %v152 = vld [vmem:[#allocation2 + $0x170] sm:$0xff]
    %v153 = vld [vmem:[#allocation2 + $0x178] sm:$0xff]
    %v154 = vld [vmem:[#allocation2 + $0x180] sm:$0xff]
    %v155 = vld [vmem:[#allocation2 + $0x188] sm:$0xff]
    %v156 = vld [vmem:[#allocation2 + $0x190] sm:$0xff]
    %v157 = vld [vmem:[#allocation2 + $0x198] sm:$0xff]
    %v158 = vld [vmem:[#allocation2 + $0x1a0] sm:$0xff]
    %v159 = vld [vmem:[#allocation2 + $0x1a8] sm:$0xff]
    %v160 = vld [vmem:[#allocation2 + $0x1b0] sm:$0xff]
    %v161 = vld [vmem:[#allocation2 + $0x1b8] sm:$0xff]
    %v162 = vld [vmem:[#allocation2 + $0x1c0] sm:$0xff]
    %v163 = vld [vmem:[#allocation2 + $0x1c8] sm:$0xff]
    %v164 = vld [vmem:[#allocation2 + $0x1d0] sm:$0xff]
    %v165 = vld [vmem:[#allocation2 + $0x1d8] sm:$0xff]
    %v166 = vld [vmem:[#allocation2 + $0x1e0] sm:$0xff]
    %v167 = vld [vmem:[#allocation2 + $0x1e8] sm:$0xff]
    %v168 = vld [vmem:[#allocation2 + $0x1f0] sm:$0xff]
    %v169 = vld [vmem:[#allocation2 + $0x1f8] sm:$0xff]
    %v170 = vld [vmem:[#allocation2 + $0x200] sm:$0xff]
    %v171 = vld [vmem:[#allocation2 + $0x208] sm:$0xff]
    %v172 = vld [vmem:[#allocation2 + $0x210] sm:$0xff]
    %v173 = vld [vmem:[#allocation2 + $0x218] sm:$0xff]
    %v174 = vld [vmem:[#allocation2 + $0x220] sm:$0xff]
    %v175 = vld [vmem:[#allocation2 + $0x228] sm:$0xff]
    %v176 = vld [vmem:[#allocation2 + $0x230] sm:$0xff]
    %v177 = vld [vmem:[#allocation2 + $0x238] sm:$0xff]
    %v178 = vld [vmem:[#allocation2 + $0x240] sm:$0xff]
    %v179 = vld [vmem:[#allocation2 + $0x248] sm:$0xff]
    %v180 = vld [vmem:[#allocation2 + $0x250] sm:$0xff]
    %v181 = vld [vmem:[#allocation2 + $0x258] sm:$0xff]
    %v182 = vld [vmem:[#allocation2 + $0x260] sm:$0xff]
    %v183 = vld [vmem:[#allocation2 + $0x268] sm:$0xff]
    %v184 = vld [vmem:[#allocation2 + $0x270] sm:$0xff]
    %v185 = vld [vmem:[#allocation2 + $0x278] sm:$0xff]
    %v186 = vld [vmem:[#allocation2 + $0x280] sm:$0xff]
    %v187 = vld [vmem:[#allocation2 + $0x288] sm:$0xff]
    %v188 = vld [vmem:[#allocation2 + $0x290] sm:$0xff]
    %v189 = vld [vmem:[#allocation2 + $0x298] sm:$0xff]
    %v190 = vld [vmem:[#allocation2 + $0x2a0] sm:$0xff]
    %v191 = vld [vmem:[#allocation2 + $0x2a8] sm:$0xff]
    %v192 = vld [vmem:[#allocation2 + $0x2b0] sm:$0xff]
    %v193 = vld [vmem:[#allocation2 + $0x2b8] sm:$0xff]
    %v194 = vld [vmem:[#allocation2 + $0x2c0] sm:$0xff]
    %v195 = vld [vmem:[#allocation2 + $0x2c8] sm:$0xff]
    %v196 = vld [vmem:[#allocation2 + $0x2d0] sm:$0xff]
    %v197 = vld [vmem:[#allocation2 + $0x2d8] sm:$0xff]
    %v198 = vld [vmem:[#allocation2 + $0x2e0] sm:$0xff]
    %v199 = vld [vmem:[#allocation2 + $0x2e8] sm:$0xff]
    %v200 = vld [vmem:[#allocation2 + $0x2f0] sm:$0xff]
    %v201 = vld [vmem:[#allocation2 + $0x2f8] sm:$0xff]
    %v202 = vld [vmem:[#allocation2 + $0x300] sm:$0xff]
    %v203 = vld [vmem:[#allocation2 + $0x308] sm:$0xff]
    %v204 = vld [vmem:[#allocation2 + $0x310] sm:$0xff]
    %v205 = vld [vmem:[#allocation2 + $0x318] sm:$0xff]
    %v206 = vld [vmem:[#allocation2 + $0x320] sm:$0xff]
    %v207 = vld [vmem:[#allocation2 + $0x328] sm:$0xff]
    %v208 = vld [vmem:[#allocation2 + $0x330] sm:$0xff]
    %v209 = vld [vmem:[#allocation2 + $0x338] sm:$0xff]
    %v210 = vld [vmem:[#allocation2 + $0x340] sm:$0xff]
    %v211 = vld [vmem:[#allocation2 + $0x348] sm:$0xff]
    %v212 = vld [vmem:[#allocation2 + $0x350] sm:$0xff]
    %v213 = vld [vmem:[#allocation2 + $0x358] sm:$0xff]
    %v214 = vld [vmem:[#allocation2 + $0x360] sm:$0xff]
    %v215 = vld [vmem:[#allocation2 + $0x368] sm:$0xff]
    %v216 = vld [vmem:[#allocation2 + $0x370] sm:$0xff]
    %v217 = vld [vmem:[#allocation2 + $0x378] sm:$0xff]
    %v218 = vld [vmem:[#allocation2 + $0x380] sm:$0xff]
    %v219 = vld [vmem:[#allocation2 + $0x388] sm:$0xff]
    %v220 = vld [vmem:[#allocation2 + $0x390] sm:$0xff]
    %v221 = vld [vmem:[#allocation2 + $0x398] sm:$0xff]
    %v222 = vld [vmem:[#allocation2 + $0x3a0] sm:$0xff]
    %v223 = vld [vmem:[#allocation2 + $0x3a8] sm:$0xff]
    %v224 = vld [vmem:[#allocation2 + $0x3b0] sm:$0xff]
    %v225 = vld [vmem:[#allocation2 + $0x3b8] sm:$0xff]
    %v226 = vld [vmem:[#allocation2 + $0x3c0] sm:$0xff]
    %v227 = vld [vmem:[#allocation2 + $0x3c8] sm:$0xff]
    %v228 = vld [vmem:[#allocation2 + $0x3d0] sm:$0xff]
    %v229 = vld [vmem:[#allocation2 + $0x3d8] sm:$0xff]
    %v230 = vld [vmem:[#allocation2 + $0x3e0] sm:$0xff]
    %v231 = vld [vmem:[#allocation2 + $0x3e8] sm:$0xff]
    %v232 = vld [vmem:[#allocation2 + $0x3f0] sm:$0xff]
    %v233 = vld [vmem:[#allocation2 + $0x3f8] sm:$0xff]
    %v234 = vld [vmem:[#allocation2 + $0x400] sm:$0xff]
    %v235 = vld [vmem:[#allocation2 + $0x408] sm:$0xff]
    %v236 = vld [vmem:[#allocation2 + $0x410] sm:$0xff]
    %v237 = vld [vmem:[#allocation2 + $0x418] sm:$0xff]
    %v238 = vld [vmem:[#allocation2 + $0x420] sm:$0xff]
    %v239 = vld [vmem:[#allocation2 + $0x428] sm:$0xff]
    %v240 = vld [vmem:[#allocation2 + $0x430] sm:$0xff]
    %v241 = vld [vmem:[#allocation2 + $0x438] sm:$0xff]
    %v242 = vld [vmem:[#allocation2 + $0x440] sm:$0xff]
    %v243 = vld [vmem:[#allocation2 + $0x448] sm:$0xff]
    %v244 = vld [vmem:[#allocation2 + $0x450] sm:$0xff]
    %v245 = vld [vmem:[#allocation2 + $0x458] sm:$0xff]
    %v246 = vld [vmem:[#allocation2 + $0x460] sm:$0xff]
    %v247 = vld [vmem:[#allocation2 + $0x468] sm:$0xff]
    %v248 = vld [vmem:[#allocation2 + $0x470] sm:$0xff]
    %v249 = vld [vmem:[#allocation2 + $0x478] sm:$0xff]
    %v250 = vld [vmem:[#allocation2 + $0x480] sm:$0xff]
    %v251 = vld [vmem:[#allocation2 + $0x488] sm:$0xff]
    %v252 = vld [vmem:[#allocation2 + $0x490] sm:$0xff]
    %v253 = vld [vmem:[#allocation2 + $0x498] sm:$0xff]
    %v254 = vld [vmem:[#allocation2 + $0x4a0] sm:$0xff]
    %v255 = vld [vmem:[#allocation2 + $0x4a8] sm:$0xff]
    %v256 = vld [vmem:[#allocation2 + $0x4b0] sm:$0xff]
    %v257 = vld [vmem:[#allocation2 + $0x4b8] sm:$0xff]
    %v258 = vld [vmem:[#allocation2 + $0x4c0] sm:$0xff]
    %v259 = vld [vmem:[#allocation2 + $0x4c8] sm:$0xff]
    %v260 = vld [vmem:[#allocation2 + $0x4d0] sm:$0xff]
    %v261 = vld [vmem:[#allocation2 + $0x4d8] sm:$0xff]
    %v262 = vld [vmem:[#allocation2 + $0x4e0] sm:$0xff]
    %v263 = vld [vmem:[#allocation2 + $0x4e8] sm:$0xff]
    %v264 = vld [vmem:[#allocation2 + $0x4f0] sm:$0xff]
    %v265 = vld [vmem:[#allocation2 + $0x4f8] sm:$0xff]
    %v266 = vld [vmem:[#allocation2 + $0x500] sm:$0xff]
    %v267 = vld [vmem:[#allocation2 + $0x508] sm:$0xff]
    %v268 = vld [vmem:[#allocation2 + $0x510] sm:$0xff]
    %v269 = vld [vmem:[#allocation2 + $0x518] sm:$0xff]
    %v270 = vld [vmem:[#allocation2 + $0x520] sm:$0xff]
    %v271 = vld [vmem:[#allocation2 + $0x528] sm:$0xff]
    %v272 = vld [vmem:[#allocation2 + $0x530] sm:$0xff]
    %v273 = vld [vmem:[#allocation2 + $0x538] sm:$0xff]
    %v274 = vld [vmem:[#allocation2 + $0x540] sm:$0xff]
    %v275 = vld [vmem:[#allocation2 + $0x548] sm:$0xff]
    %v276 = vld [vmem:[#allocation2 + $0x550] sm:$0xff]
    %v277 = vld [vmem:[#allocation2 + $0x558] sm:$0xff]
    %v278 = vld [vmem:[#allocation2 + $0x560] sm:$0xff]
    %v279 = vld [vmem:[#allocation2 + $0x568] sm:$0xff]
    %v280 = vld [vmem:[#allocation2 + $0x570] sm:$0xff]
    %v281 = vld [vmem:[#allocation2 + $0x578] sm:$0xff]
    %v282 = vld [vmem:[#allocation2 + $0x580] sm:$0xff]
    %v283 = vld [vmem:[#allocation2 + $0x588] sm:$0xff]
    %v284 = vld [vmem:[#allocation2 + $0x590] sm:$0xff]
    %v285 = vld [vmem:[#allocation2 + $0x598] sm:$0xff]
    %v286 = vld [vmem:[#allocation2 + $0x5a0] sm:$0xff]
    %v287 = vld [vmem:[#allocation2 + $0x5a8] sm:$0xff]
    %v288 = vld [vmem:[#allocation2 + $0x5b0] sm:$0xff]
    %v289 = vld [vmem:[#allocation2 + $0x5b8] sm:$0xff]
    %v290 = vld [vmem:[#allocation2 + $0x5c0] sm:$0xff]
    %v291 = vld [vmem:[#allocation2 + $0x5c8] sm:$0xff]
    %v292 = vld [vmem:[#allocation2 + $0x5d0] sm:$0xff]
    %v293 = vld [vmem:[#allocation2 + $0x5d8] sm:$0xff]
    %v294 = vld [vmem:[#allocation2 + $0x5e0] sm:$0xff]
    %v295 = vld [vmem:[#allocation2 + $0x5e8] sm:$0xff]
    %v296 = vld [vmem:[#allocation2 + $0x5f0] sm:$0xff]
    %v297 = vld [vmem:[#allocation2 + $0x5f8] sm:$0xff]
    %v298 = vld [vmem:[%s7] sm:$0xf]
    %v300 = vlaneseq
    %v301 = vshrl.u32 %v300, 7
    %v302 = vsub.s32 0, %v301
    %v303 = vrot.slane %v298, %v302
    %v304 = vlaneseq
    %v305 = vshrl.u32 %v304, 7
    %v306 = vsub.s32 1, %v305
    %v307 = vrot.slane %v298, %v306
    %v308 = vlaneseq
    %v309 = vshrl.u32 %v308, 7
    %v310 = vsub.s32 2, %v309
    %v311 = vrot.slane %v298, %v310
    %v312 = vlaneseq
    %v313 = vshrl.u32 %v312, 7
    %v314 = vsub.s32 3, %v313
    %v315 = vrot.slane %v298, %v314
    %v326 = vunpack.c.l.b16 %v100
    %v327 = vunpack.c.h.b16 %v100
    %v328 = vunpack.c.l.b16 %v101
    %v329 = vunpack.c.h.b16 %v101
    %v330 = vunpack.c.l.b16 %v102
    %v331 = vunpack.c.h.b16 %v102
    %v332 = vunpack.c.l.b16 %v103
    %v333 = vunpack.c.h.b16 %v103
    %v334 = vunpack.c.l.b16 %v104
    %v335 = vunpack.c.h.b16 %v104
    %v336 = vunpack.c.l.b16 %v105
    %v337 = vunpack.c.h.b16 %v105
    %v338 = vpack.c.b16 %v332, %v326
    %v339 = vpack.c.b16 %v333, %v327
    %v340 = vpack.c.b16 %v334, %v328
    %v341 = vpack.c.b16 %v335, %v329
    %v342 = vpack.c.b16 %v336, %v330
    %v343 = vpack.c.b16 %v337, %v331
    %v542 = vunpack.c.l.b16 %v106
    %v543 = vunpack.c.h.b16 %v106
    %v544 = vunpack.c.l.b16 %v107
    %v545 = vunpack.c.h.b16 %v107
    %v546 = vunpack.c.l.b16 %v108
    %v547 = vunpack.c.h.b16 %v108
    %v548 = vunpack.c.l.b16 %v109
    %v549 = vunpack.c.h.b16 %v109
    %v550 = vunpack.c.l.b16 %v110
    %v551 = vunpack.c.h.b16 %v110
    %v552 = vunpack.c.l.b16 %v111
    %v553 = vunpack.c.h.b16 %v111
    %v554 = vunpack.c.l.b16 %v112
    %v555 = vunpack.c.h.b16 %v112
    %v556 = vunpack.c.l.b16 %v113
    %v557 = vunpack.c.h.b16 %v113
    %v558 = vunpack.c.l.b16 %v114
    %v559 = vunpack.c.h.b16 %v114
    %v560 = vunpack.c.l.b16 %v115
    %v561 = vunpack.c.h.b16 %v115
    %v562 = vunpack.c.l.b16 %v116
    %v563 = vunpack.c.h.b16 %v116
    %v564 = vunpack.c.l.b16 %v117
    %v565 = vunpack.c.h.b16 %v117
    %v566 = vunpack.c.l.b16 %v118
    %v567 = vunpack.c.h.b16 %v118
    %v568 = vunpack.c.l.b16 %v119
    %v569 = vunpack.c.h.b16 %v119
    %v570 = vunpack.c.l.b16 %v120
    %v571 = vunpack.c.h.b16 %v120
    %v572 = vunpack.c.l.b16 %v121
    %v573 = vunpack.c.h.b16 %v121
    %v574 = vunpack.c.l.b16 %v122
    %v575 = vunpack.c.h.b16 %v122
    %v576 = vunpack.c.l.b16 %v123
    %v577 = vunpack.c.h.b16 %v123
    %v578 = vunpack.c.l.b16 %v124
    %v579 = vunpack.c.h.b16 %v124
    %v580 = vunpack.c.l.b16 %v125
    %v581 = vunpack.c.h.b16 %v125
    %v582 = vunpack.c.l.b16 %v126
    %v583 = vunpack.c.h.b16 %v126
    %v584 = vunpack.c.l.b16 %v127
    %v585 = vunpack.c.h.b16 %v127
    %v586 = vunpack.c.l.b16 %v128
    %v587 = vunpack.c.h.b16 %v128
    %v588 = vunpack.c.l.b16 %v129
    %v589 = vunpack.c.h.b16 %v129
    %v590 = vunpack.c.l.b16 %v130
    %v591 = vunpack.c.h.b16 %v130
    %v592 = vunpack.c.l.b16 %v131
    %v593 = vunpack.c.h.b16 %v131
    %v594 = vunpack.c.l.b16 %v132
    %v595 = vunpack.c.h.b16 %v132
    %v596 = vunpack.c.l.b16 %v133
    %v597 = vunpack.c.h.b16 %v133
    %v598 = vunpack.c.l.b16 %v134
    %v599 = vunpack.c.h.b16 %v134
    %v600 = vunpack.c.l.b16 %v135
    %v601 = vunpack.c.h.b16 %v135
    %v602 = vunpack.c.l.b16 %v136
    %v603 = vunpack.c.h.b16 %v136
    %v604 = vunpack.c.l.b16 %v137
    %v605 = vunpack.c.h.b16 %v137
    %v606 = vunpack.c.l.b16 %v138
    %v607 = vunpack.c.h.b16 %v138
    %v608 = vunpack.c.l.b16 %v139
    %v609 = vunpack.c.h.b16 %v139
    %v610 = vunpack.c.l.b16 %v140
    %v611 = vunpack.c.h.b16 %v140
    %v612 = vunpack.c.l.b16 %v141
    %v613 = vunpack.c.h.b16 %v141
    %v614 = vunpack.c.l.b16 %v142
    %v615 = vunpack.c.h.b16 %v142
    %v616 = vunpack.c.l.b16 %v143
    %v617 = vunpack.c.h.b16 %v143
    %v618 = vunpack.c.l.b16 %v144
    %v619 = vunpack.c.h.b16 %v144
    %v620 = vunpack.c.l.b16 %v145
    %v621 = vunpack.c.h.b16 %v145
    %v622 = vunpack.c.l.b16 %v146
    %v623 = vunpack.c.h.b16 %v146
    %v624 = vunpack.c.l.b16 %v147
    %v625 = vunpack.c.h.b16 %v147
    %v626 = vunpack.c.l.b16 %v148
    %v627 = vunpack.c.h.b16 %v148
    %v628 = vunpack.c.l.b16 %v149
    %v629 = vunpack.c.h.b16 %v149
    %v630 = vunpack.c.l.b16 %v150
    %v631 = vunpack.c.h.b16 %v150
    %v632 = vunpack.c.l.b16 %v151
    %v633 = vunpack.c.h.b16 %v151
    %v634 = vunpack.c.l.b16 %v152
    %v635 = vunpack.c.h.b16 %v152
    %v636 = vunpack.c.l.b16 %v153
    %v637 = vunpack.c.h.b16 %v153
    %v638 = vunpack.c.l.b16 %v154
    %v639 = vunpack.c.h.b16 %v154
    %v640 = vunpack.c.l.b16 %v155
    %v641 = vunpack.c.h.b16 %v155
    %v642 = vunpack.c.l.b16 %v156
    %v643 = vunpack.c.h.b16 %v156
    %v644 = vunpack.c.l.b16 %v157
    %v645 = vunpack.c.h.b16 %v157
    %v646 = vunpack.c.l.b16 %v158
    %v647 = vunpack.c.h.b16 %v158
    %v648 = vunpack.c.l.b16 %v159
    %v649 = vunpack.c.h.b16 %v159
    %v650 = vunpack.c.l.b16 %v160
    %v651 = vunpack.c.h.b16 %v160
    %v652 = vunpack.c.l.b16 %v161
    %v653 = vunpack.c.h.b16 %v161
    %v654 = vunpack.c.l.b16 %v162
    %v655 = vunpack.c.h.b16 %v162
    %v656 = vunpack.c.l.b16 %v163
    %v657 = vunpack.c.h.b16 %v163
    %v658 = vunpack.c.l.b16 %v164
    %v659 = vunpack.c.h.b16 %v164
    %v660 = vunpack.c.l.b16 %v165
    %v661 = vunpack.c.h.b16 %v165
    %v662 = vunpack.c.l.b16 %v166
    %v663 = vunpack.c.h.b16 %v166
    %v664 = vunpack.c.l.b16 %v167
    %v665 = vunpack.c.h.b16 %v167
    %v666 = vunpack.c.l.b16 %v168
    %v667 = vunpack.c.h.b16 %v168
    %v668 = vunpack.c.l.b16 %v169
    %v669 = vunpack.c.h.b16 %v169
    %v670 = vunpack.c.l.b16 %v170
    %v671 = vunpack.c.h.b16 %v170
    %v672 = vunpack.c.l.b16 %v171
    %v673 = vunpack.c.h.b16 %v171
    %v674 = vunpack.c.l.b16 %v172
    %v675 = vunpack.c.h.b16 %v172
    %v676 = vunpack.c.l.b16 %v173
    %v677 = vunpack.c.h.b16 %v173
    %v678 = vunpack.c.l.b16 %v174
    %v679 = vunpack.c.h.b16 %v174
    %v680 = vunpack.c.l.b16 %v175
    %v681 = vunpack.c.h.b16 %v175
    %v682 = vunpack.c.l.b16 %v176
    %v683 = vunpack.c.h.b16 %v176
    %v684 = vunpack.c.l.b16 %v177
    %v685 = vunpack.c.h.b16 %v177
    %v686 = vunpack.c.l.b16 %v178
    %v687 = vunpack.c.h.b16 %v178
    %v688 = vunpack.c.l.b16 %v179
    %v689 = vunpack.c.h.b16 %v179
    %v690 = vunpack.c.l.b16 %v180
    %v691 = vunpack.c.h.b16 %v180
    %v692 = vunpack.c.l.b16 %v181
    %v693 = vunpack.c.h.b16 %v181
    %v694 = vunpack.c.l.b16 %v182
    %v695 = vunpack.c.h.b16 %v182
    %v696 = vunpack.c.l.b16 %v183
    %v697 = vunpack.c.h.b16 %v183
    %v698 = vunpack.c.l.b16 %v184
    %v699 = vunpack.c.h.b16 %v184
    %v700 = vunpack.c.l.b16 %v185
    %v701 = vunpack.c.h.b16 %v185
    %v702 = vunpack.c.l.b16 %v186
    %v703 = vunpack.c.h.b16 %v186
    %v704 = vunpack.c.l.b16 %v187
    %v705 = vunpack.c.h.b16 %v187
    %v706 = vunpack.c.l.b16 %v188
    %v707 = vunpack.c.h.b16 %v188
    %v708 = vunpack.c.l.b16 %v189
    %v709 = vunpack.c.h.b16 %v189
    %v710 = vunpack.c.l.b16 %v190
    %v711 = vunpack.c.h.b16 %v190
    %v712 = vunpack.c.l.b16 %v191
    %v713 = vunpack.c.h.b16 %v191
    %v714 = vunpack.c.l.b16 %v192
    %v715 = vunpack.c.h.b16 %v192
    %v716 = vunpack.c.l.b16 %v193
    %v717 = vunpack.c.h.b16 %v193
    %v718 = vunpack.c.l.b16 %v194
    %v719 = vunpack.c.h.b16 %v194
    %v720 = vunpack.c.l.b16 %v195
    %v721 = vunpack.c.h.b16 %v195
    %v722 = vunpack.c.l.b16 %v196
    %v723 = vunpack.c.h.b16 %v196
    %v724 = vunpack.c.l.b16 %v197
    %v725 = vunpack.c.h.b16 %v197
    %v726 = vunpack.c.l.b16 %v198
    %v727 = vunpack.c.h.b16 %v198
    %v728 = vunpack.c.l.b16 %v199
    %v729 = vunpack.c.h.b16 %v199
    %v730 = vunpack.c.l.b16 %v200
    %v731 = vunpack.c.h.b16 %v200
    %v732 = vunpack.c.l.b16 %v201
    %v733 = vunpack.c.h.b16 %v201
    %v734 = vunpack.c.l.b16 %v202
    %v735 = vunpack.c.h.b16 %v202
    %v736 = vunpack.c.l.b16 %v203
    %v737 = vunpack.c.h.b16 %v203
    %v738 = vunpack.c.l.b16 %v204
    %v739 = vunpack.c.h.b16 %v204
    %v740 = vunpack.c.l.b16 %v205
    %v741 = vunpack.c.h.b16 %v205
    %v742 = vunpack.c.l.b16 %v206
    %v743 = vunpack.c.h.b16 %v206
    %v744 = vunpack.c.l.b16 %v207
    %v745 = vunpack.c.h.b16 %v207
    %v746 = vunpack.c.l.b16 %v208
    %v747 = vunpack.c.h.b16 %v208
    %v748 = vunpack.c.l.b16 %v209
    %v749 = vunpack.c.h.b16 %v209
    %v750 = vunpack.c.l.b16 %v210
    %v751 = vunpack.c.h.b16 %v210
    %v752 = vunpack.c.l.b16 %v211
    %v753 = vunpack.c.h.b16 %v211
    %v754 = vunpack.c.l.b16 %v212
    %v755 = vunpack.c.h.b16 %v212
    %v756 = vunpack.c.l.b16 %v213
    %v757 = vunpack.c.h.b16 %v213
    %v758 = vunpack.c.l.b16 %v214
    %v759 = vunpack.c.h.b16 %v214
    %v760 = vunpack.c.l.b16 %v215
    %v761 = vunpack.c.h.b16 %v215
    %v762 = vunpack.c.l.b16 %v216
    %v763 = vunpack.c.h.b16 %v216
    %v764 = vunpack.c.l.b16 %v217
    %v765 = vunpack.c.h.b16 %v217
    %v766 = vunpack.c.l.b16 %v218
    %v767 = vunpack.c.h.b16 %v218
    %v768 = vunpack.c.l.b16 %v219
    %v769 = vunpack.c.h.b16 %v219
    %v770 = vunpack.c.l.b16 %v220
    %v771 = vunpack.c.h.b16 %v220
    %v772 = vunpack.c.l.b16 %v221
    %v773 = vunpack.c.h.b16 %v221
    %v774 = vunpack.c.l.b16 %v222
    %v775 = vunpack.c.h.b16 %v222
    %v776 = vunpack.c.l.b16 %v223
    %v777 = vunpack.c.h.b16 %v223
    %v778 = vunpack.c.l.b16 %v224
    %v779 = vunpack.c.h.b16 %v224
    %v780 = vunpack.c.l.b16 %v225
    %v781 = vunpack.c.h.b16 %v225
    %v782 = vunpack.c.l.b16 %v226
    %v783 = vunpack.c.h.b16 %v226
    %v784 = vunpack.c.l.b16 %v227
    %v785 = vunpack.c.h.b16 %v227
    %v786 = vunpack.c.l.b16 %v228
    %v787 = vunpack.c.h.b16 %v228
    %v788 = vunpack.c.l.b16 %v229
    %v789 = vunpack.c.h.b16 %v229
    %v790 = vunpack.c.l.b16 %v230
    %v791 = vunpack.c.h.b16 %v230
    %v792 = vunpack.c.l.b16 %v231
    %v793 = vunpack.c.h.b16 %v231
    %v794 = vunpack.c.l.b16 %v232
    %v795 = vunpack.c.h.b16 %v232
    %v796 = vunpack.c.l.b16 %v233
    %v797 = vunpack.c.h.b16 %v233
    %v798 = vunpack.c.l.b16 %v234
    %v799 = vunpack.c.h.b16 %v234
    %v800 = vunpack.c.l.b16 %v235
    %v801 = vunpack.c.h.b16 %v235
    %v802 = vunpack.c.l.b16 %v236
    %v803 = vunpack.c.h.b16 %v236
    %v804 = vunpack.c.l.b16 %v237
    %v805 = vunpack.c.h.b16 %v237
    %v806 = vunpack.c.l.b16 %v238
    %v807 = vunpack.c.h.b16 %v238
    %v808 = vunpack.c.l.b16 %v239
    %v809 = vunpack.c.h.b16 %v239
    %v810 = vunpack.c.l.b16 %v240
    %v811 = vunpack.c.h.b16 %v240
    %v812 = vunpack.c.l.b16 %v241
    %v813 = vunpack.c.h.b16 %v241
    %v814 = vunpack.c.l.b16 %v242
    %v815 = vunpack.c.h.b16 %v242
    %v816 = vunpack.c.l.b16 %v243
    %v817 = vunpack.c.h.b16 %v243
    %v818 = vunpack.c.l.b16 %v244
    %v819 = vunpack.c.h.b16 %v244
    %v820 = vunpack.c.l.b16 %v245
    %v821 = vunpack.c.h.b16 %v245
    %v822 = vunpack.c.l.b16 %v246
    %v823 = vunpack.c.h.b16 %v246
    %v824 = vunpack.c.l.b16 %v247
    %v825 = vunpack.c.h.b16 %v247
    %v826 = vunpack.c.l.b16 %v248
    %v827 = vunpack.c.h.b16 %v248
    %v828 = vunpack.c.l.b16 %v249
    %v829 = vunpack.c.h.b16 %v249
    %v830 = vunpack.c.l.b16 %v250
    %v831 = vunpack.c.h.b16 %v250
    %v832 = vunpack.c.l.b16 %v251
    %v833 = vunpack.c.h.b16 %v251
    %v834 = vunpack.c.l.b16 %v252
    %v835 = vunpack.c.h.b16 %v252
    %v836 = vunpack.c.l.b16 %v253
    %v837 = vunpack.c.h.b16 %v253
    %v838 = vunpack.c.l.b16 %v254
    %v839 = vunpack.c.h.b16 %v254
    %v840 = vunpack.c.l.b16 %v255
    %v841 = vunpack.c.h.b16 %v255
    %v842 = vunpack.c.l.b16 %v256
    %v843 = vunpack.c.h.b16 %v256
    %v844 = vunpack.c.l.b16 %v257
    %v845 = vunpack.c.h.b16 %v257
    %v846 = vunpack.c.l.b16 %v258
    %v847 = vunpack.c.h.b16 %v258
    %v848 = vunpack.c.l.b16 %v259
    %v849 = vunpack.c.h.b16 %v259
    %v850 = vunpack.c.l.b16 %v260
    %v851 = vunpack.c.h.b16 %v260
    %v852 = vunpack.c.l.b16 %v261
    %v853 = vunpack.c.h.b16 %v261
    %v854 = vunpack.c.l.b16 %v262
    %v855 = vunpack.c.h.b16 %v262
    %v856 = vunpack.c.l.b16 %v263
    %v857 = vunpack.c.h.b16 %v263
    %v858 = vunpack.c.l.b16 %v264
    %v859 = vunpack.c.h.b16 %v264
    %v860 = vunpack.c.l.b16 %v265
    %v861 = vunpack.c.h.b16 %v265
    %v862 = vunpack.c.l.b16 %v266
    %v863 = vunpack.c.h.b16 %v266
    %v864 = vunpack.c.l.b16 %v267
    %v865 = vunpack.c.h.b16 %v267
    %v866 = vunpack.c.l.b16 %v268
    %v867 = vunpack.c.h.b16 %v268
    %v868 = vunpack.c.l.b16 %v269
    %v869 = vunpack.c.h.b16 %v269
    %v870 = vunpack.c.l.b16 %v270
    %v871 = vunpack.c.h.b16 %v270
    %v872 = vunpack.c.l.b16 %v271
    %v873 = vunpack.c.h.b16 %v271
    %v874 = vunpack.c.l.b16 %v272
    %v875 = vunpack.c.h.b16 %v272
    %v876 = vunpack.c.l.b16 %v273
    %v877 = vunpack.c.h.b16 %v273
    %v878 = vunpack.c.l.b16 %v274
    %v879 = vunpack.c.h.b16 %v274
    %v880 = vunpack.c.l.b16 %v275
    %v881 = vunpack.c.h.b16 %v275
    %v882 = vunpack.c.l.b16 %v276
    %v883 = vunpack.c.h.b16 %v276
    %v884 = vunpack.c.l.b16 %v277
    %v885 = vunpack.c.h.b16 %v277
    %v886 = vunpack.c.l.b16 %v278
    %v887 = vunpack.c.h.b16 %v278
    %v888 = vunpack.c.l.b16 %v279
    %v889 = vunpack.c.h.b16 %v279
    %v890 = vunpack.c.l.b16 %v280
    %v891 = vunpack.c.h.b16 %v280
    %v892 = vunpack.c.l.b16 %v281
    %v893 = vunpack.c.h.b16 %v281
    %v894 = vunpack.c.l.b16 %v282
    %v895 = vunpack.c.h.b16 %v282
    %v896 = vunpack.c.l.b16 %v283
    %v897 = vunpack.c.h.b16 %v283
    %v898 = vunpack.c.l.b16 %v284
    %v899 = vunpack.c.h.b16 %v284
    %v900 = vunpack.c.l.b16 %v285
    %v901 = vunpack.c.h.b16 %v285
    %v902 = vunpack.c.l.b16 %v286
    %v903 = vunpack.c.h.b16 %v286
    %v904 = vunpack.c.l.b16 %v287
    %v905 = vunpack.c.h.b16 %v287
    %v906 = vunpack.c.l.b16 %v288
    %v907 = vunpack.c.h.b16 %v288
    %v908 = vunpack.c.l.b16 %v289
    %v909 = vunpack.c.h.b16 %v289
    %v910 = vunpack.c.l.b16 %v290
    %v911 = vunpack.c.h.b16 %v290
    %v912 = vunpack.c.l.b16 %v291
    %v913 = vunpack.c.h.b16 %v291
    %v914 = vunpack.c.l.b16 %v292
    %v915 = vunpack.c.h.b16 %v292
    %v916 = vunpack.c.l.b16 %v293
    %v917 = vunpack.c.h.b16 %v293
    %v918 = vunpack.c.l.b16 %v294
    %v919 = vunpack.c.h.b16 %v294
    %v920 = vunpack.c.l.b16 %v295
    %v921 = vunpack.c.h.b16 %v295
    %v922 = vunpack.c.l.b16 %v296
    %v923 = vunpack.c.h.b16 %v296
    %v924 = vunpack.c.l.b16 %v297
    %v925 = vunpack.c.h.b16 %v297
    %v926 = vpack.c.b16 %v546, %v542
    %v927 = vpack.c.b16 %v547, %v543
    %v928 = vpack.c.b16 %v548, %v544
    %v929 = vpack.c.b16 %v549, %v545
    %v930 = vpack.c.b16 %v554, %v550
    %v931 = vpack.c.b16 %v555, %v551
    %v932 = vpack.c.b16 %v556, %v552
    %v933 = vpack.c.b16 %v557, %v553
    %v934 = vpack.c.b16 %v562, %v558
    %v935 = vpack.c.b16 %v563, %v559
    %v936 = vpack.c.b16 %v564, %v560
    %v937 = vpack.c.b16 %v565, %v561
    %v938 = vpack.c.b16 %v570, %v566
    %v939 = vpack.c.b16 %v571, %v567
    %v940 = vpack.c.b16 %v572, %v568
    %v941 = vpack.c.b16 %v573, %v569
    %v942 = vpack.c.b16 %v578, %v574
    %v943 = vpack.c.b16 %v579, %v575
    %v944 = vpack.c.b16 %v580, %v576
    %v945 = vpack.c.b16 %v581, %v577
    %v946 = vpack.c.b16 %v586, %v582
    %v947 = vpack.c.b16 %v587, %v583
    %v948 = vpack.c.b16 %v588, %v584
    %v949 = vpack.c.b16 %v589, %v585
    %v950 = vpack.c.b16 %v594, %v590
    %v951 = vpack.c.b16 %v595, %v591
    %v952 = vpack.c.b16 %v596, %v592
    %v953 = vpack.c.b16 %v597, %v593
    %v954 = vpack.c.b16 %v602, %v598
    %v955 = vpack.c.b16 %v603, %v599
    %v956 = vpack.c.b16 %v604, %v600
    %v957 = vpack.c.b16 %v605, %v601
    %v958 = vpack.c.b16 %v610, %v606
    %v959 = vpack.c.b16 %v611, %v607
    %v960 = vpack.c.b16 %v612, %v608
    %v961 = vpack.c.b16 %v613, %v609
    %v962 = vpack.c.b16 %v618, %v614
    %v963 = vpack.c.b16 %v619, %v615
    %v964 = vpack.c.b16 %v620, %v616
    %v965 = vpack.c.b16 %v621, %v617
    %v966 = vpack.c.b16 %v626, %v622
    %v967 = vpack.c.b16 %v627, %v623
    %v968 = vpack.c.b16 %v628, %v624
    %v969 = vpack.c.b16 %v629, %v625
    %v970 = vpack.c.b16 %v634, %v630
    %v971 = vpack.c.b16 %v635, %v631
    %v972 = vpack.c.b16 %v636, %v632
    %v973 = vpack.c.b16 %v637, %v633
    %v974 = vpack.c.b16 %v642, %v638
    %v975 = vpack.c.b16 %v643, %v639
    %v976 = vpack.c.b16 %v644, %v640
    %v977 = vpack.c.b16 %v645, %v641
    %v978 = vpack.c.b16 %v650, %v646
    %v979 = vpack.c.b16 %v651, %v647
    %v980 = vpack.c.b16 %v652, %v648
    %v981 = vpack.c.b16 %v653, %v649
    %v982 = vpack.c.b16 %v658, %v654
    %v983 = vpack.c.b16 %v659, %v655
    %v984 = vpack.c.b16 %v660, %v656
    %v985 = vpack.c.b16 %v661, %v657
    %v986 = vpack.c.b16 %v666, %v662
    %v987 = vpack.c.b16 %v667, %v663
    %v988 = vpack.c.b16 %v668, %v664
    %v989 = vpack.c.b16 %v669, %v665
    %v990 = vpack.c.b16 %v674, %v670
    %v991 = vpack.c.b16 %v675, %v671
    %v992 = vpack.c.b16 %v676, %v672
    %v993 = vpack.c.b16 %v677, %v673
    %v994 = vpack.c.b16 %v682, %v678
    %v995 = vpack.c.b16 %v683, %v679
    %v996 = vpack.c.b16 %v684, %v680
    %v997 = vpack.c.b16 %v685, %v681
    %v998 = vpack.c.b16 %v690, %v686
    %v999 = vpack.c.b16 %v691, %v687
    %v1000 = vpack.c.b16 %v692, %v688
    %v1001 = vpack.c.b16 %v693, %v689
    %v1002 = vpack.c.b16 %v698, %v694
    %v1003 = vpack.c.b16 %v699, %v695
    %v1004 = vpack.c.b16 %v700, %v696
    %v1005 = vpack.c.b16 %v701, %v697
    %v1006 = vpack.c.b16 %v706, %v702
    %v1007 = vpack.c.b16 %v707, %v703
    %v1008 = vpack.c.b16 %v708, %v704
    %v1009 = vpack.c.b16 %v709, %v705
    %v1010 = vpack.c.b16 %v714, %v710
    %v1011 = vpack.c.b16 %v715, %v711
    %v1012 = vpack.c.b16 %v716, %v712
    %v1013 = vpack.c.b16 %v717, %v713
    %v1014 = vpack.c.b16 %v722, %v718
    %v1015 = vpack.c.b16 %v723, %v719
    %v1016 = vpack.c.b16 %v724, %v720
    %v1017 = vpack.c.b16 %v725, %v721
    %v1018 = vpack.c.b16 %v730, %v726
    %v1019 = vpack.c.b16 %v731, %v727
    %v1020 = vpack.c.b16 %v732, %v728
    %v1021 = vpack.c.b16 %v733, %v729
    %v1022 = vpack.c.b16 %v738, %v734
    %v1023 = vpack.c.b16 %v739, %v735
    %v1024 = vpack.c.b16 %v740, %v736
    %v1025 = vpack.c.b16 %v741, %v737
    %v1026 = vpack.c.b16 %v746, %v742
    %v1027 = vpack.c.b16 %v747, %v743
    %v1028 = vpack.c.b16 %v748, %v744
    %v1029 = vpack.c.b16 %v749, %v745
    %v1030 = vpack.c.b16 %v754, %v750
    %v1031 = vpack.c.b16 %v755, %v751
    %v1032 = vpack.c.b16 %v756, %v752
    %v1033 = vpack.c.b16 %v757, %v753
    %v1034 = vpack.c.b16 %v762, %v758
    %v1035 = vpack.c.b16 %v763, %v759
    %v1036 = vpack.c.b16 %v764, %v760
    %v1037 = vpack.c.b16 %v765, %v761
    %v1038 = vpack.c.b16 %v770, %v766
    %v1039 = vpack.c.b16 %v771, %v767
    %v1040 = vpack.c.b16 %v772, %v768
    %v1041 = vpack.c.b16 %v773, %v769
    %v1042 = vpack.c.b16 %v778, %v774
    %v1043 = vpack.c.b16 %v779, %v775
    %v1044 = vpack.c.b16 %v780, %v776
    %v1045 = vpack.c.b16 %v781, %v777
    %v1046 = vpack.c.b16 %v786, %v782
    %v1047 = vpack.c.b16 %v787, %v783
    %v1048 = vpack.c.b16 %v788, %v784
    %v1049 = vpack.c.b16 %v789, %v785
    %v1050 = vpack.c.b16 %v794, %v790
    %v1051 = vpack.c.b16 %v795, %v791
    %v1052 = vpack.c.b16 %v796, %v792
    %v1053 = vpack.c.b16 %v797, %v793
    %v1054 = vpack.c.b16 %v802, %v798
    %v1055 = vpack.c.b16 %v803, %v799
    %v1056 = vpack.c.b16 %v804, %v800
    %v1057 = vpack.c.b16 %v805, %v801
    %v1058 = vpack.c.b16 %v810, %v806
    %v1059 = vpack.c.b16 %v811, %v807
    %v1060 = vpack.c.b16 %v812, %v808
    %v1061 = vpack.c.b16 %v813, %v809
    %v1062 = vpack.c.b16 %v818, %v814
    %v1063 = vpack.c.b16 %v819, %v815
    %v1064 = vpack.c.b16 %v820, %v816
    %v1065 = vpack.c.b16 %v821, %v817
    %v1066 = vpack.c.b16 %v826, %v822
    %v1067 = vpack.c.b16 %v827, %v823
    %v1068 = vpack.c.b16 %v828, %v824
    %v1069 = vpack.c.b16 %v829, %v825
    %v1070 = vpack.c.b16 %v834, %v830
    %v1071 = vpack.c.b16 %v835, %v831
    %v1072 = vpack.c.b16 %v836, %v832
    %v1073 = vpack.c.b16 %v837, %v833
    %v1074 = vpack.c.b16 %v842, %v838
    %v1075 = vpack.c.b16 %v843, %v839
    %v1076 = vpack.c.b16 %v844, %v840
    %v1077 = vpack.c.b16 %v845, %v841
    %v1078 = vpack.c.b16 %v850, %v846
    %v1079 = vpack.c.b16 %v851, %v847
    %v1080 = vpack.c.b16 %v852, %v848
    %v1081 = vpack.c.b16 %v853, %v849
    %v1082 = vpack.c.b16 %v858, %v854
    %v1083 = vpack.c.b16 %v859, %v855
    %v1084 = vpack.c.b16 %v860, %v856
    %v1085 = vpack.c.b16 %v861, %v857
    %v1086 = vpack.c.b16 %v866, %v862
    %v1087 = vpack.c.b16 %v867, %v863
    %v1088 = vpack.c.b16 %v868, %v864
    %v1089 = vpack.c.b16 %v869, %v865
    %v1090 = vpack.c.b16 %v874, %v870
    %v1091 = vpack.c.b16 %v875, %v871
    %v1092 = vpack.c.b16 %v876, %v872
    %v1093 = vpack.c.b16 %v877, %v873
    %v1094 = vpack.c.b16 %v882, %v878
    %v1095 = vpack.c.b16 %v883, %v879
    %v1096 = vpack.c.b16 %v884, %v880
    %v1097 = vpack.c.b16 %v885, %v881
    %v1098 = vpack.c.b16 %v890, %v886
    %v1099 = vpack.c.b16 %v891, %v887
    %v1100 = vpack.c.b16 %v892, %v888
    %v1101 = vpack.c.b16 %v893, %v889
    %v1102 = vpack.c.b16 %v898, %v894
    %v1103 = vpack.c.b16 %v899, %v895
    %v1104 = vpack.c.b16 %v900, %v896
    %v1105 = vpack.c.b16 %v901, %v897
    %v1106 = vpack.c.b16 %v906, %v902
    %v1107 = vpack.c.b16 %v907, %v903
    %v1108 = vpack.c.b16 %v908, %v904
    %v1109 = vpack.c.b16 %v909, %v905
    %v1110 = vpack.c.b16 %v914, %v910
    %v1111 = vpack.c.b16 %v915, %v911
    %v1112 = vpack.c.b16 %v916, %v912
    %v1113 = vpack.c.b16 %v917, %v913
    %v1114 = vpack.c.b16 %v922, %v918
    %v1115 = vpack.c.b16 %v923, %v919
    %v1116 = vpack.c.b16 %v924, %v920
    %v1117 = vpack.c.b16 %v925, %v921
    %1310 = vmatprep.subr.bf16.mxu0 %v927
    %1311 = vmatpush1.bf16.msra.mxu0 %v926
    %1312 = vmatprep.subr.bf16.mxu0 %v931
    %1313 = vmatpush1.bf16.msra.mxu0 %v930
    %1314 = vmatprep.subr.bf16.mxu0 %v935
    %1315 = vmatpush1.bf16.msra.mxu0 %v934
    %1316 = vmatprep.subr.bf16.mxu0 %v939
    %1317 = vmatpush1.bf16.msra.mxu0 %v938
    %1318 = vmatprep.subr.bf16.mxu0 %v943
    %1319 = vmatpush1.bf16.msra.mxu0 %v942
    %1320 = vmatprep.subr.bf16.mxu0 %v947
    %1321 = vmatpush1.bf16.msra.mxu0 %v946
    %1322 = vmatprep.subr.bf16.mxu0 %v951
    %1323 = vmatpush1.bf16.msra.mxu0 %v950
    %1324 = vmatprep.subr.bf16.mxu0 %v955
    %1325 = vmatpush1.bf16.msra.mxu0 %v954
    %1326 = vmatprep.subr.bf16.mxu0 %v959
    %1327 = vmatpush1.bf16.msra.mxu0 %v958
    %1328 = vmatprep.subr.bf16.mxu0 %v963
    %1329 = vmatpush1.bf16.msra.mxu0 %v962
    %1330 = vmatprep.subr.bf16.mxu0 %v967
    %1331 = vmatpush1.bf16.msra.mxu0 %v966
    %1332 = vmatprep.subr.bf16.mxu0 %v971
    %1333 = vmatpush1.bf16.msra.mxu0 %v970
    %1334 = vmatprep.subr.bf16.mxu0 %v975
    %1335 = vmatpush1.bf16.msra.mxu0 %v974
    %1336 = vmatprep.subr.bf16.mxu0 %v979
    %1337 = vmatpush1.bf16.msra.mxu0 %v978
    %1338 = vmatprep.subr.bf16.mxu0 %v983
    %1339 = vmatpush1.bf16.msra.mxu0 %v982
    %1340 = vmatprep.subr.bf16.mxu0 %v987
    %1341 = vmatpush1.bf16.msra.mxu0 %v986
    %1342 = vmatprep.mubr.bf16.mxu0 %v339
    %1343 = vmatmul.mubr.bf16.gmra.mrb[0].mxu0 %v338
    %v1344 = vpop.f32.mrb[0].mxu0
    %v1345 = vadd.f32 %v303, %v1344
    %v1346 = vpop.f32.mrb[0].mxu0
    %v1347 = vadd.f32 %v307, %v1346
    %v1348 = vpop.f32.mrb[0].mxu0
    %v1349 = vadd.f32 %v303, %v1348
    %v1350 = vpop.f32.mrb[0].mxu0
    %v1351 = vadd.f32 %v307, %v1350
    %1352 = vdwg.mxu0
    %1353 = vmatprep.subr.bf16.mxu0 %v991
    %1354 = vmatpush1.bf16.msra.mxu0 %v990
    %1355 = vmatprep.subr.bf16.mxu0 %v995
    %1356 = vmatpush1.bf16.msra.mxu0 %v994
    %1357 = vmatprep.subr.bf16.mxu0 %v999
    %1358 = vmatpush1.bf16.msra.mxu0 %v998
    %1359 = vmatprep.subr.bf16.mxu0 %v1003
    %1360 = vmatpush1.bf16.msra.mxu0 %v1002
    %1361 = vmatprep.subr.bf16.mxu0 %v1007
    %1362 = vmatpush1.bf16.msra.mxu0 %v1006
    %1363 = vmatprep.subr.bf16.mxu0 %v1011
    %1364 = vmatpush1.bf16.msra.mxu0 %v1010
    %1365 = vmatprep.subr.bf16.mxu0 %v1015
    %1366 = vmatpush1.bf16.msra.mxu0 %v1014
    %1367 = vmatprep.subr.bf16.mxu0 %v1019
    %1368 = vmatpush1.bf16.msra.mxu0 %v1018
    %1369 = vmatprep.subr.bf16.mxu0 %v1023
    %1370 = vmatpush1.bf16.msra.mxu0 %v1022
    %1371 = vmatprep.subr.bf16.mxu0 %v1027
    %1372 = vmatpush1.bf16.msra.mxu0 %v1026
    %1373 = vmatprep.subr.bf16.mxu0 %v1031
    %1374 = vmatpush1.bf16.msra.mxu0 %v1030
    %1375 = vmatprep.subr.bf16.mxu0 %v1035
    %1376 = vmatpush1.bf16.msra.mxu0 %v1034
    %1377 = vmatprep.subr.bf16.mxu0 %v1039
    %1378 = vmatpush1.bf16.msra.mxu0 %v1038
    %1379 = vmatprep.subr.bf16.mxu0 %v1043
    %1380 = vmatpush1.bf16.msra.mxu0 %v1042
    %1381 = vmatprep.subr.bf16.mxu0 %v1047
    %1382 = vmatpush1.bf16.msra.mxu0 %v1046
    %1383 = vmatprep.subr.bf16.mxu0 %v1051
    %1384 = vmatpush1.bf16.msra.mxu0 %v1050
    %1385 = vmatprep.mubr.bf16.mxu0 %v341
    %1386 = vmatmul.mubr.bf16.gmra.mrb[0].mxu0 %v340
    %v1387 = vpop.f32.mrb[0].mxu0
    %v1388 = vadd.f32 %v1345, %v1387
    %v1389 = vpop.f32.mrb[0].mxu0
    %v1390 = vadd.f32 %v1347, %v1389
    %v1391 = vpop.f32.mrb[0].mxu0
    %v1392 = vadd.f32 %v1349, %v1391
    %v1393 = vpop.f32.mrb[0].mxu0
    %v1394 = vadd.f32 %v1351, %v1393
    %1395 = vdwg.mxu0
    %1396 = vmatprep.subr.bf16.mxu0 %v1055
    %1397 = vmatpush1.bf16.msra.mxu0 %v1054
    %1398 = vmatprep.subr.bf16.mxu0 %v1059
    %1399 = vmatpush1.bf16.msra.mxu0 %v1058
    %1400 = vmatprep.subr.bf16.mxu0 %v1063
    %1401 = vmatpush1.bf16.msra.mxu0 %v1062
    %1402 = vmatprep.subr.bf16.mxu0 %v1067
    %1403 = vmatpush1.bf16.msra.mxu0 %v1066
    %1404 = vmatprep.subr.bf16.mxu0 %v1071
    %1405 = vmatpush1.bf16.msra.mxu0 %v1070
    %1406 = vmatprep.subr.bf16.mxu0 %v1075
    %1407 = vmatpush1.bf16.msra.mxu0 %v1074
    %1408 = vmatprep.subr.bf16.mxu0 %v1079
    %1409 = vmatpush1.bf16.msra.mxu0 %v1078
    %1410 = vmatprep.subr.bf16.mxu0 %v1083
    %1411 = vmatpush1.bf16.msra.mxu0 %v1082
    %1412 = vmatprep.subr.bf16.mxu0 %v1087
    %1413 = vmatpush1.bf16.msra.mxu0 %v1086
    %1414 = vmatprep.subr.bf16.mxu0 %v1091
    %1415 = vmatpush1.bf16.msra.mxu0 %v1090
    %1416 = vmatprep.subr.bf16.mxu0 %v1095
    %1417 = vmatpush1.bf16.msra.mxu0 %v1094
    %1418 = vmatprep.subr.bf16.mxu0 %v1099
    %1419 = vmatpush1.bf16.msra.mxu0 %v1098
    %1420 = vmatprep.subr.bf16.mxu0 %v1103
    %1421 = vmatpush1.bf16.msra.mxu0 %v1102
    %1422 = vmatprep.subr.bf16.mxu0 %v1107
    %1423 = vmatpush1.bf16.msra.mxu0 %v1106
    %1424 = vmatprep.subr.bf16.mxu0 %v1111
    %1425 = vmatpush1.bf16.msra.mxu0 %v1110
    %1426 = vmatprep.subr.bf16.mxu0 %v1115
    %1427 = vmatpush1.bf16.msra.mxu0 %v1114
    %1428 = vmatprep.mubr.bf16.mxu0 %v343
    %1429 = vmatmul.mubr.bf16.gmra.mrb[0].mxu0 %v342
    %v1430 = vpop.f32.mrb[0].mxu0
    %v1431 = vadd.f32 %v1388, %v1430
    %v1432 = vpop.f32.mrb[0].mxu0
    %v1433 = vadd.f32 %v1390, %v1432
    %v1434 = vpop.f32.mrb[0].mxu0
    %v1435 = vadd.f32 %v1392, %v1434
    %v1436 = vpop.f32.mrb[0].mxu0
    %v1437 = vadd.f32 %v1394, %v1436
    %1438 = vdwg.mxu0
    %1439 = vmatprep.subr.bf16.mxu0 %v929
    %1440 = vmatpush1.bf16.msra.mxu0 %v928
    %1441 = vmatprep.subr.bf16.mxu0 %v933
    %1442 = vmatpush1.bf16.msra.mxu0 %v932
    %1443 = vmatprep.subr.bf16.mxu0 %v937
    %1444 = vmatpush1.bf16.msra.mxu0 %v936
    %1445 = vmatprep.subr.bf16.mxu0 %v941
    %1446 = vmatpush1.bf16.msra.mxu0 %v940
    %1447 = vmatprep.subr.bf16.mxu0 %v945
    %1448 = vmatpush1.bf16.msra.mxu0 %v944
    %1449 = vmatprep.subr.bf16.mxu0 %v949
    %1450 = vmatpush1.bf16.msra.mxu0 %v948
    %1451 = vmatprep.subr.bf16.mxu0 %v953
    %1452 = vmatpush1.bf16.msra.mxu0 %v952
    %1453 = vmatprep.subr.bf16.mxu0 %v957
    %1454 = vmatpush1.bf16.msra.mxu0 %v956
    %1455 = vmatprep.subr.bf16.mxu0 %v961
    %1456 = vmatpush1.bf16.msra.mxu0 %v960
    %1457 = vmatprep.subr.bf16.mxu0 %v965
    %1458 = vmatpush1.bf16.msra.mxu0 %v964
    %1459 = vmatprep.subr.bf16.mxu0 %v969
    %1460 = vmatpush1.bf16.msra.mxu0 %v968
    %1461 = vmatprep.subr.bf16.mxu0 %v973
    %1462 = vmatpush1.bf16.msra.mxu0 %v972
    %1463 = vmatprep.subr.bf16.mxu0 %v977
    %1464 = vmatpush1.bf16.msra.mxu0 %v976
    %1465 = vmatprep.subr.bf16.mxu0 %v981
    %1466 = vmatpush1.bf16.msra.mxu0 %v980
    %1467 = vmatprep.subr.bf16.mxu0 %v985
    %1468 = vmatpush1.bf16.msra.mxu0 %v984
    %1469 = vmatprep.subr.bf16.mxu0 %v989
    %1470 = vmatpush1.bf16.msra.mxu0 %v988
    %1471 = vmatprep.mubr.bf16.mxu0 %v339
    %1472 = vmatmul.mubr.bf16.gmra.mrb[0].mxu0 %v338
    %v1473 = vpop.f32.mrb[0].mxu0
    %v1474 = vadd.f32 %v311, %v1473
    %v1475 = vpop.f32.mrb[0].mxu0
    %v1476 = vadd.f32 %v315, %v1475
    %v1477 = vpop.f32.mrb[0].mxu0
    %v1478 = vadd.f32 %v311, %v1477
    %v1479 = vpop.f32.mrb[0].mxu0
    %v1480 = vadd.f32 %v315, %v1479
    %1481 = vdwg.mxu0
    %1482 = vmatprep.subr.bf16.mxu0 %v993
    %1483 = vmatpush1.bf16.msra.mxu0 %v992
    %1484 = vmatprep.subr.bf16.mxu0 %v997
    %1485 = vmatpush1.bf16.msra.mxu0 %v996
    %1486 = vmatprep.subr.bf16.mxu0 %v1001
    %1487 = vmatpush1.bf16.msra.mxu0 %v1000
    %1488 = vmatprep.subr.bf16.mxu0 %v1005
    %1489 = vmatpush1.bf16.msra.mxu0 %v1004
    %1490 = vmatprep.subr.bf16.mxu0 %v1009
    %1491 = vmatpush1.bf16.msra.mxu0 %v1008
    %1492 = vmatprep.subr.bf16.mxu0 %v1013
    %1493 = vmatpush1.bf16.msra.mxu0 %v1012
    %1494 = vmatprep.subr.bf16.mxu0 %v1017
    %1495 = vmatpush1.bf16.msra.mxu0 %v1016
    %1496 = vmatprep.subr.bf16.mxu0 %v1021
    %1497 = vmatpush1.bf16.msra.mxu0 %v1020
    %1498 = vmatprep.subr.bf16.mxu0 %v1025
    %1499 = vmatpush1.bf16.msra.mxu0 %v1024
    %1500 = vmatprep.subr.bf16.mxu0 %v1029
    %1501 = vmatpush1.bf16.msra.mxu0 %v1028
    %1502 = vmatprep.subr.bf16.mxu0 %v1033
    %1503 = vmatpush1.bf16.msra.mxu0 %v1032
    %1504 = vmatprep.subr.bf16.mxu0 %v1037
    %1505 = vmatpush1.bf16.msra.mxu0 %v1036
    %1506 = vmatprep.subr.bf16.mxu0 %v1041
    %1507 = vmatpush1.bf16.msra.mxu0 %v1040
    %1508 = vmatprep.subr.bf16.mxu0 %v1045
    %1509 = vmatpush1.bf16.msra.mxu0 %v1044
    %1510 = vmatprep.subr.bf16.mxu0 %v1049
    %1511 = vmatpush1.bf16.msra.mxu0 %v1048
    %1512 = vmatprep.subr.bf16.mxu0 %v1053
    %1513 = vmatpush1.bf16.msra.mxu0 %v1052
    %1514 = vmatprep.mubr.bf16.mxu0 %v341
    %1515 = vmatmul.mubr.bf16.gmra.mrb[0].mxu0 %v340
    %v1516 = vpop.f32.mrb[0].mxu0
    %v1517 = vadd.f32 %v1474, %v1516
    %v1518 = vpop.f32.mrb[0].mxu0
    %v1519 = vadd.f32 %v1476, %v1518
    %v1520 = vpop.f32.mrb[0].mxu0
    %v1521 = vadd.f32 %v1478, %v1520
    %v1522 = vpop.f32.mrb[0].mxu0
    %v1523 = vadd.f32 %v1480, %v1522
    %1524 = vdwg.mxu0
    %1525 = vmatprep.subr.bf16.mxu0 %v1057
    %1526 = vmatpush1.bf16.msra.mxu0 %v1056
    %1527 = vmatprep.subr.bf16.mxu0 %v1061
    %1528 = vmatpush1.bf16.msra.mxu0 %v1060
    %1529 = vmatprep.subr.bf16.mxu0 %v1065
    %1530 = vmatpush1.bf16.msra.mxu0 %v1064
    %1531 = vmatprep.subr.bf16.mxu0 %v1069
    %1532 = vmatpush1.bf16.msra.mxu0 %v1068
    %1533 = vmatprep.subr.bf16.mxu0 %v1073
    %1534 = vmatpush1.bf16.msra.mxu0 %v1072
    %1535 = vmatprep.subr.bf16.mxu0 %v1077
    %1536 = vmatpush1.bf16.msra.mxu0 %v1076
    %1537 = vmatprep.subr.bf16.mxu0 %v1081
    %1538 = vmatpush1.bf16.msra.mxu0 %v1080
    %1539 = vmatprep.subr.bf16.mxu0 %v1085
    %1540 = vmatpush1.bf16.msra.mxu0 %v1084
    %1541 = vmatprep.subr.bf16.mxu0 %v1089
    %1542 = vmatpush1.bf16.msra.mxu0 %v1088
    %1543 = vmatprep.subr.bf16.mxu0 %v1093
    %1544 = vmatpush1.bf16.msra.mxu0 %v1092
    %1545 = vmatprep.subr.bf16.mxu0 %v1097
    %1546 = vmatpush1.bf16.msra.mxu0 %v1096
    %1547 = vmatprep.subr.bf16.mxu0 %v1101
    %1548 = vmatpush1.bf16.msra.mxu0 %v1100
    %1549 = vmatprep.subr.bf16.mxu0 %v1105
    %1550 = vmatpush1.bf16.msra.mxu0 %v1104
    %1551 = vmatprep.subr.bf16.mxu0 %v1109
    %1552 = vmatpush1.bf16.msra.mxu0 %v1108
    %1553 = vmatprep.subr.bf16.mxu0 %v1113
    %1554 = vmatpush1.bf16.msra.mxu0 %v1112
    %1555 = vmatprep.subr.bf16.mxu0 %v1117
    %1556 = vmatpush1.bf16.msra.mxu0 %v1116
    %1557 = vmatprep.mubr.bf16.mxu0 %v343
    %1558 = vmatmul.mubr.bf16.gmra.mrb[0].mxu0 %v342
    %v1559 = vpop.f32.mrb[0].mxu0
    %v1560 = vadd.f32 %v1517, %v1559
    %v1561 = vpop.f32.mrb[0].mxu0
    %v1562 = vadd.f32 %v1519, %v1561
    %v1563 = vpop.f32.mrb[0].mxu0
    %v1564 = vadd.f32 %v1521, %v1563
    %v1565 = vpop.f32.mrb[0].mxu0
    %v1566 = vadd.f32 %v1523, %v1565
    %1567 = vdwg.mxu0
    %v1568 = vmax.f32 %v1431, 0.0
    %v1569 = vmax.f32 %v1433, 0.0
    %v1570 = vmax.f32 %v1560, 0.0
    %v1571 = vmax.f32 %v1562, 0.0
    %v1572 = vmax.f32 %v1435, 0.0
    %v1573 = vmax.f32 %v1437, 0.0
    %v1574 = vmax.f32 %v1564, 0.0
    %v1575 = vmax.f32 %v1566, 0.0
    %v1576 = vpack.c.bf16 %v1572, %v1568
    %v1577 = vpack.c.bf16 %v1573, %v1569
    %v1578 = vpack.c.bf16 %v1574, %v1570
    %v1579 = vpack.c.bf16 %v1575, %v1571
    %v1580 = vld [vmem:[#allocation4] sm:$0xf]
    %v1581 = vld [vmem:[#allocation4 + $0x4] sm:$0xf]
    %v1582 = vld [vmem:[#allocation4 + $0x8] sm:$0xf]
    %v1583 = vld [vmem:[#allocation4 + $0xc] sm:$0xf]
    %v1584 = vld [vmem:[#allocation4 + $0x10] sm:$0xf]
    %v1585 = vld [vmem:[#allocation4 + $0x14] sm:$0xf]
    %v1586 = vld [vmem:[#allocation4 + $0x18] sm:$0xf]
    %v1587 = vld [vmem:[#allocation4 + $0x1c] sm:$0xf]
    %v1588 = vld [vmem:[#allocation4 + $0x20] sm:$0xf]
    %v1589 = vld [vmem:[#allocation4 + $0x24] sm:$0xf]
    %v1590 = vld [vmem:[#allocation4 + $0x28] sm:$0xf]
    %v1591 = vld [vmem:[#allocation4 + $0x2c] sm:$0xf]
    %v1592 = vld [vmem:[#allocation4 + $0x30] sm:$0xf]
    %v1593 = vld [vmem:[#allocation4 + $0x34] sm:$0xf]
    %v1594 = vld [vmem:[#allocation4 + $0x38] sm:$0xf]
    %v1595 = vld [vmem:[#allocation4 + $0x3c] sm:$0xf]
    %v1596 = vld [vmem:[#allocation4 + $0x40] sm:$0xf]
    %v1597 = vld [vmem:[#allocation4 + $0x44] sm:$0xf]
    %v1598 = vld [vmem:[#allocation4 + $0x48] sm:$0xf]
    %v1599 = vld [vmem:[#allocation4 + $0x4c] sm:$0xf]
    %v1600 = vld [vmem:[#allocation4 + $0x50] sm:$0xf]
    %v1601 = vld [vmem:[#allocation4 + $0x54] sm:$0xf]
    %v1602 = vld [vmem:[#allocation4 + $0x58] sm:$0xf]
    %v1603 = vld [vmem:[#allocation4 + $0x5c] sm:$0xf]
    %v1604 = vld [vmem:[#allocation4 + $0x60] sm:$0xf]
    %v1605 = vld [vmem:[#allocation4 + $0x64] sm:$0xf]
    %v1606 = vld [vmem:[#allocation4 + $0x68] sm:$0xf]
    %v1607 = vld [vmem:[#allocation4 + $0x6c] sm:$0xf]
    %v1608 = vld [vmem:[#allocation4 + $0x70] sm:$0xf]
    %v1609 = vld [vmem:[#allocation4 + $0x74] sm:$0xf]
    %v1610 = vld [vmem:[#allocation4 + $0x78] sm:$0xf]
    %v1611 = vld [vmem:[#allocation4 + $0x7c] sm:$0xf]
    %v1612 = vld [vmem:[#allocation4 + $0x80] sm:$0xf]
    %v1613 = vld [vmem:[#allocation4 + $0x84] sm:$0xf]
    %v1614 = vld [vmem:[#allocation4 + $0x88] sm:$0xf]
    %v1615 = vld [vmem:[#allocation4 + $0x8c] sm:$0xf]
    %v1616 = vld [vmem:[#allocation4 + $0x90] sm:$0xf]
    %v1617 = vld [vmem:[#allocation4 + $0x94] sm:$0xf]
    %v1618 = vld [vmem:[#allocation4 + $0x98] sm:$0xf]
    %v1619 = vld [vmem:[#allocation4 + $0x9c] sm:$0xf]
    %v1620 = vld [vmem:[#allocation4 + $0xa0] sm:$0xf]
    %v1621 = vld [vmem:[#allocation4 + $0xa4] sm:$0xf]
    %v1622 = vld [vmem:[#allocation4 + $0xa8] sm:$0xf]
    %v1623 = vld [vmem:[#allocation4 + $0xac] sm:$0xf]
    %v1624 = vld [vmem:[#allocation4 + $0xb0] sm:$0xf]
    %v1625 = vld [vmem:[#allocation4 + $0xb4] sm:$0xf]
    %v1626 = vld [vmem:[#allocation4 + $0xb8] sm:$0xf]
    %v1627 = vld [vmem:[#allocation4 + $0xbc] sm:$0xf]
    %v1628 = vld [vmem:[#allocation4 + $0xc0] sm:$0xf]
    %v1629 = vld [vmem:[#allocation4 + $0xc4] sm:$0xf]
    %v1630 = vld [vmem:[#allocation4 + $0xc8] sm:$0xf]
    %v1631 = vld [vmem:[#allocation4 + $0xcc] sm:$0xf]
    %v1632 = vld [vmem:[#allocation4 + $0xd0] sm:$0xf]
    %v1633 = vld [vmem:[#allocation4 + $0xd4] sm:$0xf]
    %v1634 = vld [vmem:[#allocation4 + $0xd8] sm:$0xf]
    %v1635 = vld [vmem:[#allocation4 + $0xdc] sm:$0xf]
    %v1636 = vld [vmem:[#allocation4 + $0xe0] sm:$0xf]
    %v1637 = vld [vmem:[#allocation4 + $0xe4] sm:$0xf]
    %v1638 = vld [vmem:[#allocation4 + $0xe8] sm:$0xf]
    %v1639 = vld [vmem:[#allocation4 + $0xec] sm:$0xf]
    %v1640 = vld [vmem:[#allocation4 + $0xf0] sm:$0xf]
    %v1641 = vld [vmem:[#allocation4 + $0xf4] sm:$0xf]
    %v1642 = vld [vmem:[#allocation4 + $0xf8] sm:$0xf]
    %v1643 = vld [vmem:[#allocation4 + $0xfc] sm:$0xf]
    %v1644 = vld [vmem:[%s8] sm:$0x1]
    %v1646 = vlaneseq
    %v1647 = vshrl.u32 %v1646, 7
    %v1648 = vsub.s32 0, %v1647
    %v1649 = vrot.slane %v1644, %v1648
    %v1715 = vunpack.c.l.b16 %v1580
    %v1716 = vunpack.c.l.b16 %v1581
    %v1717 = vunpack.c.l.b16 %v1582
    %v1718 = vunpack.c.l.b16 %v1583
    %v1719 = vunpack.c.l.b16 %v1584
    %v1720 = vunpack.c.l.b16 %v1585
    %v1721 = vunpack.c.l.b16 %v1586
    %v1722 = vunpack.c.l.b16 %v1587
    %v1723 = vunpack.c.l.b16 %v1588
    %v1724 = vunpack.c.l.b16 %v1589
    %v1725 = vunpack.c.l.b16 %v1590
    %v1726 = vunpack.c.l.b16 %v1591
    %v1727 = vunpack.c.l.b16 %v1592
    %v1728 = vunpack.c.l.b16 %v1593
    %v1729 = vunpack.c.l.b16 %v1594
    %v1730 = vunpack.c.l.b16 %v1595
    %v1731 = vunpack.c.l.b16 %v1596
    %v1732 = vunpack.c.l.b16 %v1597
    %v1733 = vunpack.c.l.b16 %v1598
    %v1734 = vunpack.c.l.b16 %v1599
    %v1735 = vunpack.c.l.b16 %v1600
    %v1736 = vunpack.c.l.b16 %v1601
    %v1737 = vunpack.c.l.b16 %v1602
    %v1738 = vunpack.c.l.b16 %v1603
    %v1739 = vunpack.c.l.b16 %v1604
    %v1740 = vunpack.c.l.b16 %v1605
    %v1741 = vunpack.c.l.b16 %v1606
    %v1742 = vunpack.c.l.b16 %v1607
    %v1743 = vunpack.c.l.b16 %v1608
    %v1744 = vunpack.c.l.b16 %v1609
    %v1745 = vunpack.c.l.b16 %v1610
    %v1746 = vunpack.c.l.b16 %v1611
    %v1747 = vunpack.c.l.b16 %v1612
    %v1748 = vunpack.c.l.b16 %v1613
    %v1749 = vunpack.c.l.b16 %v1614
    %v1750 = vunpack.c.l.b16 %v1615
    %v1751 = vunpack.c.l.b16 %v1616
    %v1752 = vunpack.c.l.b16 %v1617
    %v1753 = vunpack.c.l.b16 %v1618
    %v1754 = vunpack.c.l.b16 %v1619
    %v1755 = vunpack.c.l.b16 %v1620
    %v1756 = vunpack.c.l.b16 %v1621
    %v1757 = vunpack.c.l.b16 %v1622
    %v1758 = vunpack.c.l.b16 %v1623
    %v1759 = vunpack.c.l.b16 %v1624
    %v1760 = vunpack.c.l.b16 %v1625
    %v1761 = vunpack.c.l.b16 %v1626
    %v1762 = vunpack.c.l.b16 %v1627
    %v1763 = vunpack.c.l.b16 %v1628
    %v1764 = vunpack.c.l.b16 %v1629
    %v1765 = vunpack.c.l.b16 %v1630
    %v1766 = vunpack.c.l.b16 %v1631
    %v1767 = vunpack.c.l.b16 %v1632
    %v1768 = vunpack.c.l.b16 %v1633
    %v1769 = vunpack.c.l.b16 %v1634
    %v1770 = vunpack.c.l.b16 %v1635
    %v1771 = vunpack.c.l.b16 %v1636
    %v1772 = vunpack.c.l.b16 %v1637
    %v1773 = vunpack.c.l.b16 %v1638
    %v1774 = vunpack.c.l.b16 %v1639
    %v1775 = vunpack.c.l.b16 %v1640
    %v1776 = vunpack.c.l.b16 %v1641
    %v1777 = vunpack.c.l.b16 %v1642
    %v1778 = vunpack.c.l.b16 %v1643
    %v1779 = vpack.c.b16 %v1716, %v1715
    %v1780 = vpack.c.b16 %v1718, %v1717
    %v1781 = vpack.c.b16 %v1720, %v1719
    %v1782 = vpack.c.b16 %v1722, %v1721
    %v1783 = vpack.c.b16 %v1724, %v1723
    %v1784 = vpack.c.b16 %v1726, %v1725
    %v1785 = vpack.c.b16 %v1728, %v1727
    %v1786 = vpack.c.b16 %v1730, %v1729
    %v1787 = vpack.c.b16 %v1732, %v1731
    %v1788 = vpack.c.b16 %v1734, %v1733
    %v1789 = vpack.c.b16 %v1736, %v1735
    %v1790 = vpack.c.b16 %v1738, %v1737
    %v1791 = vpack.c.b16 %v1740, %v1739
    %v1792 = vpack.c.b16 %v1742, %v1741
    %v1793 = vpack.c.b16 %v1744, %v1743
    %v1794 = vpack.c.b16 %v1746, %v1745
    %v1795 = vpack.c.b16 %v1748, %v1747
    %v1796 = vpack.c.b16 %v1750, %v1749
    %v1797 = vpack.c.b16 %v1752, %v1751
    %v1798 = vpack.c.b16 %v1754, %v1753
    %v1799 = vpack.c.b16 %v1756, %v1755
    %v1800 = vpack.c.b16 %v1758, %v1757
    %v1801 = vpack.c.b16 %v1760, %v1759
    %v1802 = vpack.c.b16 %v1762, %v1761
    %v1803 = vpack.c.b16 %v1764, %v1763
    %v1804 = vpack.c.b16 %v1766, %v1765
    %v1805 = vpack.c.b16 %v1768, %v1767
    %v1806 = vpack.c.b16 %v1770, %v1769
    %v1807 = vpack.c.b16 %v1772, %v1771
    %v1808 = vpack.c.b16 %v1774, %v1773
    %v1809 = vpack.c.b16 %v1776, %v1775
    %v1810 = vpack.c.b16 %v1778, %v1777
    %1843 = vmatprep.subr.bf16.mxu0 0
    %1844 = vmatpush1.bf16.msra.mxu0 %v1779
    %1845 = vmatprep.subr.bf16.mxu0 0
    %1846 = vmatpush1.bf16.msra.mxu0 %v1780
    %1847 = vmatprep.subr.bf16.mxu0 0
    %1848 = vmatpush1.bf16.msra.mxu0 %v1781
    %1849 = vmatprep.subr.bf16.mxu0 0
    %1850 = vmatpush1.bf16.msra.mxu0 %v1782
    %1851 = vmatprep.subr.bf16.mxu0 0
    %1852 = vmatpush1.bf16.msra.mxu0 %v1783
    %1853 = vmatprep.subr.bf16.mxu0 0
    %1854 = vmatpush1.bf16.msra.mxu0 %v1784
    %1855 = vmatprep.subr.bf16.mxu0 0
    %1856 = vmatpush1.bf16.msra.mxu0 %v1785
    %1857 = vmatprep.subr.bf16.mxu0 0
    %1858 = vmatpush1.bf16.msra.mxu0 %v1786
    %1859 = vmatprep.subr.bf16.mxu0 0
    %1860 = vmatpush1.bf16.msra.mxu0 %v1787
    %1861 = vmatprep.subr.bf16.mxu0 0
    %1862 = vmatpush1.bf16.msra.mxu0 %v1788
    %1863 = vmatprep.subr.bf16.mxu0 0
    %1864 = vmatpush1.bf16.msra.mxu0 %v1789
    %1865 = vmatprep.subr.bf16.mxu0 0
    %1866 = vmatpush1.bf16.msra.mxu0 %v1790
    %1867 = vmatprep.subr.bf16.mxu0 0
    %1868 = vmatpush1.bf16.msra.mxu0 %v1791
    %1869 = vmatprep.subr.bf16.mxu0 0
    %1870 = vmatpush1.bf16.msra.mxu0 %v1792
    %1871 = vmatprep.subr.bf16.mxu0 0
    %1872 = vmatpush1.bf16.msra.mxu0 %v1793
    %1873 = vmatprep.subr.bf16.mxu0 0
    %1874 = vmatpush1.bf16.msra.mxu0 %v1794
    %1875 = vmatprep.mubr.bf16.mxu0 %v1577
    %1876 = vmatmul.mubr.bf16.gmra.mrb[0].mxu0 %v1576
    %v1877 = vpop.f32.mrb[0].mxu0
    %v1878 = vadd.f32 %v1649, %v1877
    %v1879 = vpop.f32.mrb[0].mxu0
    %v1880 = vpop.f32.mrb[0].mxu0
    %v1881 = vadd.f32 %v1649, %v1880
    %v1882 = vpop.f32.mrb[0].mxu0
    %1883 = vdwg.mxu0
    %1884 = vmatprep.subr.bf16.mxu0 0
    %1885 = vmatpush1.bf16.msra.mxu0 %v1795
    %1886 = vmatprep.subr.bf16.mxu0 0
    %1887 = vmatpush1.bf16.msra.mxu0 %v1796
    %1888 = vmatprep.subr.bf16.mxu0 0
    %1889 = vmatpush1.bf16.msra.mxu0 %v1797
    %1890 = vmatprep.subr.bf16.mxu0 0
    %1891 = vmatpush1.bf16.msra.mxu0 %v1798
    %1892 = vmatprep.subr.bf16.mxu0 0
    %1893 = vmatpush1.bf16.msra.mxu0 %v1799
    %1894 = vmatprep.subr.bf16.mxu0 0
    %1895 = vmatpush1.bf16.msra.mxu0 %v1800
    %1896 = vmatprep.subr.bf16.mxu0 0
    %1897 = vmatpush1.bf16.msra.mxu0 %v1801
    %1898 = vmatprep.subr.bf16.mxu0 0
    %1899 = vmatpush1.bf16.msra.mxu0 %v1802
    %1900 = vmatprep.subr.bf16.mxu0 0
    %1901 = vmatpush1.bf16.msra.mxu0 %v1803
    %1902 = vmatprep.subr.bf16.mxu0 0
    %1903 = vmatpush1.bf16.msra.mxu0 %v1804
    %1904 = vmatprep.subr.bf16.mxu0 0
    %1905 = vmatpush1.bf16.msra.mxu0 %v1805
    %1906 = vmatprep.subr.bf16.mxu0 0
    %1907 = vmatpush1.bf16.msra.mxu0 %v1806
    %1908 = vmatprep.subr.bf16.mxu0 0
    %1909 = vmatpush1.bf16.msra.mxu0 %v1807
    %1910 = vmatprep.subr.bf16.mxu0 0
    %1911 = vmatpush1.bf16.msra.mxu0 %v1808
    %1912 = vmatprep.subr.bf16.mxu0 0
    %1913 = vmatpush1.bf16.msra.mxu0 %v1809
    %1914 = vmatprep.subr.bf16.mxu0 0
    %1915 = vmatpush1.bf16.msra.mxu0 %v1810
    %1916 = vmatprep.mubr.bf16.mxu0 %v1579
    %1917 = vmatmul.mubr.bf16.gmra.mrb[0].mxu0 %v1578
    %v1918 = vpop.f32.mrb[0].mxu0
    %v1919 = vadd.f32 %v1878, %v1918
    %v1920 = vpop.f32.mrb[0].mxu0
    %v1921 = vpop.f32.mrb[0].mxu0
    %v1922 = vadd.f32 %v1881, %v1921
    %v1923 = vpop.f32.mrb[0].mxu0
    %1924 = vdwg.mxu0
    %v1925 = vmax.f32 %v1919, 0.0
    %v1926 = vmax.f32 %v1922, 0.0
    %v1927 = vpack.c.bf16 %v1926, %v1925
    %v1928 = vld [vmem:[%s3] sm:$0xf]
    %v1929 = vld [vmem:[%s3 + $0x4] sm:$0xf]
    %v1930 = vld [vmem:[%s3 + $0x8] sm:$0xf]
    %v1931 = vld [vmem:[%s3 + $0xc] sm:$0xf]
    %v1932 = vld [vmem:[%s3 + $0x10] sm:$0xf]
    %v1933 = vld [vmem:[%s3 + $0x14] sm:$0xf]
    %v1934 = vld [vmem:[%s3 + $0x18] sm:$0xf]
    %v1935 = vld [vmem:[%s3 + $0x1c] sm:$0xf]
    %v1936 = vld [vmem:[%s3 + $0x20] sm:$0xf]
    %v1937 = vld [vmem:[%s3 + $0x24] sm:$0xf]
    %v1938 = vld [vmem:[%s3 + $0x28] sm:$0xf]
    %v1939 = vld [vmem:[%s3 + $0x2c] sm:$0xf]
    %v1940 = vld [vmem:[%s3 + $0x30] sm:$0xf]
    %v1941 = vld [vmem:[%s3 + $0x34] sm:$0xf]
    %v1942 = vld [vmem:[%s3 + $0x38] sm:$0xf]
    %v1943 = vld [vmem:[%s3 + $0x3c] sm:$0xf]
    %v1944 = vld [vmem:[%s9] sm:$0x1]
    %v1946 = vlaneseq
    %v1947 = vshrl.u32 %v1946, 7
    %v1948 = vsub.s32 0, %v1947
    %v1949 = vrot.slane %v1944, %v1948
    %v1967 = vunpack.c.l.b16 %v1928
    %v1968 = vunpack.c.l.b16 %v1929
    %v1969 = vunpack.c.l.b16 %v1930
    %v1970 = vunpack.c.l.b16 %v1931
    %v1971 = vunpack.c.l.b16 %v1932
    %v1972 = vunpack.c.l.b16 %v1933
    %v1973 = vunpack.c.l.b16 %v1934
    %v1974 = vunpack.c.l.b16 %v1935
    %v1975 = vunpack.c.l.b16 %v1936
    %v1976 = vunpack.c.l.b16 %v1937
    %v1977 = vunpack.c.l.b16 %v1938
    %v1978 = vunpack.c.l.b16 %v1939
    %v1979 = vunpack.c.l.b16 %v1940
    %v1980 = vunpack.c.l.b16 %v1941
    %v1981 = vunpack.c.l.b16 %v1942
    %v1982 = vunpack.c.l.b16 %v1943
    %v1983 = vpack.c.b16 %v1968, %v1967
    %v1984 = vpack.c.b16 %v1970, %v1969
    %v1985 = vpack.c.b16 %v1972, %v1971
    %v1986 = vpack.c.b16 %v1974, %v1973
    %v1987 = vpack.c.b16 %v1976, %v1975
    %v1988 = vpack.c.b16 %v1978, %v1977
    %v1989 = vpack.c.b16 %v1980, %v1979
    %v1990 = vpack.c.b16 %v1982, %v1981
    %1999 = vmatprep.subr.bf16.mxu0 0
    %2000 = vmatpush1.bf16.msra.mxu0 %v1983
    %2001 = vmatprep.subr.bf16.mxu0 0
    %2002 = vmatpush1.bf16.msra.mxu0 %v1984
    %2003 = vmatprep.subr.bf16.mxu0 0
    %2004 = vmatpush1.bf16.msra.mxu0 %v1985
    %2005 = vmatprep.subr.bf16.mxu0 0
    %2006 = vmatpush1.bf16.msra.mxu0 %v1986
    %2007 = vmatprep.subr.bf16.mxu0 0
    %2008 = vmatpush1.bf16.msra.mxu0 %v1987
    %2009 = vmatprep.subr.bf16.mxu0 0
    %2010 = vmatpush1.bf16.msra.mxu0 %v1988
    %2011 = vmatprep.subr.bf16.mxu0 0
    %2012 = vmatpush1.bf16.msra.mxu0 %v1989
    %2013 = vmatprep.subr.bf16.mxu0 0
    %2014 = vmatpush1.bf16.msra.mxu0 %v1990
    %2015 = vmatprep.subr.bf16.mxu0 0
    %2016 = vmatpush1.bf16.msra.mxu0 0
    %2017 = vmatprep.subr.bf16.mxu0 0
    %2018 = vmatpush1.bf16.msra.mxu0 0
    %2019 = vmatprep.subr.bf16.mxu0 0
    %2020 = vmatpush1.bf16.msra.mxu0 0
    %2021 = vmatprep.subr.bf16.mxu0 0
    %2022 = vmatpush1.bf16.msra.mxu0 0
    %2023 = vmatprep.subr.bf16.mxu0 0
    %2024 = vmatpush1.bf16.msra.mxu0 0
    %2025 = vmatprep.subr.bf16.mxu0 0
    %2026 = vmatpush1.bf16.msra.mxu0 0
    %2027 = vmatprep.subr.bf16.mxu0 0
    %2028 = vmatpush1.bf16.msra.mxu0 0
    %2029 = vmatprep.subr.bf16.mxu0 0
    %2030 = vmatpush1.bf16.msra.mxu0 0
    %2031 = vmatprep.mubr.bf16.mxu0 0
    %2032 = vmatmul.mubr.bf16.gmra.mrb[0].mxu0 %v1927
    %v2033 = vpop.f32.mrb[0].mxu0
    %v2034 = vadd.f32 %v1949, %v2033
    %v2035 = vpop.f32.mrb[0].mxu0
    %v2036 = vpop.f32.mrb[0].mxu0
    %v2037 = vadd.f32 %v1949, %v2036
    %v2038 = vpop.f32.mrb[0].mxu0
    %2039 = vdwg.mxu0
    %v2040 = vmax.f32 %v2034, 0.0
    %v2041 = vmax.f32 %v2037, 0.0
    %v2042 = vpack.c.bf16 %v2041, %v2040
    %v2043 = vld [vmem:[%s4] sm:$0xf]
    %v2044 = vld [vmem:[%s4 + $0x4] sm:$0xf]
    %v2045 = vld [vmem:[%s4 + $0x8] sm:$0xf]
    %v2046 = vld [vmem:[%s4 + $0xc] sm:$0xf]
    %v2047 = vld [vmem:[%s4 + $0x10] sm:$0xf]
    %v2048 = vld [vmem:[%s4 + $0x14] sm:$0xf]
    %v2049 = vld [vmem:[%s4 + $0x18] sm:$0xf]
    %v2050 = vld [vmem:[%s4 + $0x1c] sm:$0xf]
    %v2051 = vld [vmem:[%s4 + $0x20] sm:$0xf]
    %v2052 = vld [vmem:[%s4 + $0x24] sm:$0xf]
    %v2053 = vld [vmem:[%s4 + $0x28] sm:$0xf]
    %v2054 = vld [vmem:[%s4 + $0x2c] sm:$0xf]
    %v2055 = vld [vmem:[%s4 + $0x30] sm:$0xf]
    %v2056 = vld [vmem:[%s4 + $0x34] sm:$0xf]
    %v2057 = vld [vmem:[%s4 + $0x38] sm:$0xf]
    %v2058 = vld [vmem:[%s4 + $0x3c] sm:$0xf]
    %v2059 = vld [vmem:[%s10] sm:$0x1]
    %v2061 = vlaneseq
    %v2062 = vshrl.u32 %v2061, 7
    %v2063 = vsub.s32 0, %v2062
    %v2064 = vrot.slane %v2059, %v2063
    %v2082 = vunpack.c.l.b16 %v2043
    %v2083 = vunpack.c.l.b16 %v2044
    %v2084 = vunpack.c.l.b16 %v2045
    %v2085 = vunpack.c.l.b16 %v2046
    %v2086 = vunpack.c.l.b16 %v2047
    %v2087 = vunpack.c.l.b16 %v2048
    %v2088 = vunpack.c.l.b16 %v2049
    %v2089 = vunpack.c.l.b16 %v2050
    %v2090 = vunpack.c.l.b16 %v2051
    %v2091 = vunpack.c.l.b16 %v2052
    %v2092 = vunpack.c.l.b16 %v2053
    %v2093 = vunpack.c.l.b16 %v2054
    %v2094 = vunpack.c.l.b16 %v2055
    %v2095 = vunpack.c.l.b16 %v2056
    %v2096 = vunpack.c.l.b16 %v2057
    %v2097 = vunpack.c.l.b16 %v2058
    %v2098 = vpack.c.b16 %v2083, %v2082
    %v2099 = vpack.c.b16 %v2085, %v2084
    %v2100 = vpack.c.b16 %v2087, %v2086
    %v2101 = vpack.c.b16 %v2089, %v2088
    %v2102 = vpack.c.b16 %v2091, %v2090
    %v2103 = vpack.c.b16 %v2093, %v2092
    %v2104 = vpack.c.b16 %v2095, %v2094
    %v2105 = vpack.c.b16 %v2097, %v2096
    %2114 = vmatprep.subr.bf16.mxu0 0
    %2115 = vmatpush1.bf16.msra.mxu0 %v2098
    %2116 = vmatprep.subr.bf16.mxu0 0
    %2117 = vmatpush1.bf16.msra.mxu0 %v2099
    %2118 = vmatprep.subr.bf16.mxu0 0
    %2119 = vmatpush1.bf16.msra.mxu0 %v2100
    %2120 = vmatprep.subr.bf16.mxu0 0
    %2121 = vmatpush1.bf16.msra.mxu0 %v2101
    %2122 = vmatprep.subr.bf16.mxu0 0
    %2123 = vmatpush1.bf16.msra.mxu0 %v2102
    %2124 = vmatprep.subr.bf16.mxu0 0
    %2125 = vmatpush1.bf16.msra.mxu0 %v2103
    %2126 = vmatprep.subr.bf16.mxu0 0
    %2127 = vmatpush1.bf16.msra.mxu0 %v2104
    %2128 = vmatprep.subr.bf16.mxu0 0
    %2129 = vmatpush1.bf16.msra.mxu0 %v2105
    %2130 = vmatprep.subr.bf16.mxu0 0
    %2131 = vmatpush1.bf16.msra.mxu0 0
    %2132 = vmatprep.subr.bf16.mxu0 0
    %2133 = vmatpush1.bf16.msra.mxu0 0
    %2134 = vmatprep.subr.bf16.mxu0 0
    %2135 = vmatpush1.bf16.msra.mxu0 0
    %2136 = vmatprep.subr.bf16.mxu0 0
    %2137 = vmatpush1.bf16.msra.mxu0 0
    %2138 = vmatprep.subr.bf16.mxu0 0
    %2139 = vmatpush1.bf16.msra.mxu0 0
    %2140 = vmatprep.subr.bf16.mxu0 0
    %2141 = vmatpush1.bf16.msra.mxu0 0
    %2142 = vmatprep.subr.bf16.mxu0 0
    %2143 = vmatpush1.bf16.msra.mxu0 0
    %2144 = vmatprep.subr.bf16.mxu0 0
    %2145 = vmatpush1.bf16.msra.mxu0 0
    %2146 = vmatprep.mubr.bf16.mxu0 0
    %2147 = vmatmul.mubr.bf16.gmra.mrb[0].mxu0 %v2042
    %v2148 = vpop.f32.mrb[0].mxu0
    %v2149 = vadd.f32 %v2064, %v2148
    %v2150 = vpop.f32.mrb[0].mxu0
    %v2151 = vpop.f32.mrb[0].mxu0
    %v2152 = vadd.f32 %v2064, %v2151
    %v2153 = vpop.f32.mrb[0].mxu0
    %2154 = vdwg.mxu0
    %v2155 = vmax.f32 %v2149, 0.0
    %v2156 = vmax.f32 %v2152, 0.0
    %v2157 = vpack.c.bf16 %v2156, %v2155
    %v2158 = vld [vmem:[#allocation6] sm:$0xf]
    %v2159 = vld [vmem:[#allocation6 + $0x4] sm:$0xf]
    %v2160 = vld [vmem:[#allocation6 + $0x8] sm:$0xf]
    %v2161 = vld [vmem:[#allocation6 + $0xc] sm:$0xf]
    %v2162 = vld [vmem:[#allocation6 + $0x10] sm:$0xf]
    %v2163 = vld [vmem:[#allocation6 + $0x14] sm:$0xf]
    %v2164 = vld [vmem:[#allocation6 + $0x18] sm:$0xf]
    %v2165 = vld [vmem:[#allocation6 + $0x1c] sm:$0xf]
    %v2166 = vld [vmem:[#allocation6 + $0x20] sm:$0xf]
    %v2167 = vld [vmem:[#allocation6 + $0x24] sm:$0xf]
    %v2168 = vld [vmem:[#allocation6 + $0x28] sm:$0xf]
    %v2169 = vld [vmem:[#allocation6 + $0x2c] sm:$0xf]
    %v2170 = vld [vmem:[#allocation6 + $0x30] sm:$0xf]
    %v2171 = vld [vmem:[#allocation6 + $0x34] sm:$0xf]
    %v2172 = vld [vmem:[#allocation6 + $0x38] sm:$0xf]
    %v2173 = vld [vmem:[#allocation6 + $0x3c] sm:$0xf]
    %v2174 = vld [vmem:[%s11] sm:$0x1]
    %v2176 = vlaneseq
    %v2177 = vshrl.u32 %v2176, 7
    %v2178 = vsub.s32 0, %v2177
    %v2179 = vrot.slane %v2174, %v2178
    %v2197 = vunpack.c.l.b16 %v2158
    %v2198 = vunpack.c.l.b16 %v2159
    %v2199 = vunpack.c.l.b16 %v2160
    %v2200 = vunpack.c.l.b16 %v2161
    %v2201 = vunpack.c.l.b16 %v2162
    %v2202 = vunpack.c.l.b16 %v2163
    %v2203 = vunpack.c.l.b16 %v2164
    %v2204 = vunpack.c.l.b16 %v2165
    %v2205 = vunpack.c.l.b16 %v2166
    %v2206 = vunpack.c.l.b16 %v2167
    %v2207 = vunpack.c.l.b16 %v2168
    %v2208 = vunpack.c.l.b16 %v2169
    %v2209 = vunpack.c.l.b16 %v2170
    %v2210 = vunpack.c.l.b16 %v2171
    %v2211 = vunpack.c.l.b16 %v2172
    %v2212 = vunpack.c.l.b16 %v2173
    %v2213 = vpack.c.b16 %v2198, %v2197
    %v2214 = vpack.c.b16 %v2200, %v2199
    %v2215 = vpack.c.b16 %v2202, %v2201
    %v2216 = vpack.c.b16 %v2204, %v2203
    %v2217 = vpack.c.b16 %v2206, %v2205
    %v2218 = vpack.c.b16 %v2208, %v2207
    %v2219 = vpack.c.b16 %v2210, %v2209
    %v2220 = vpack.c.b16 %v2212, %v2211
    %2229 = vmatprep.subr.bf16.mxu0 0
    %2230 = vmatpush1.bf16.msra.mxu0 %v2213
    %2231 = vmatprep.subr.bf16.mxu0 0
    %2232 = vmatpush1.bf16.msra.mxu0 %v2214
    %2233 = vmatprep.subr.bf16.mxu0 0
    %2234 = vmatpush1.bf16.msra.mxu0 %v2215
    %2235 = vmatprep.subr.bf16.mxu0 0
    %2236 = vmatpush1.bf16.msra.mxu0 %v2216
    %2237 = vmatprep.subr.bf16.mxu0 0
    %2238 = vmatpush1.bf16.msra.mxu0 %v2217
    %2239 = vmatprep.subr.bf16.mxu0 0
    %2240 = vmatpush1.bf16.msra.mxu0 %v2218
    %2241 = vmatprep.subr.bf16.mxu0 0
    %2242 = vmatpush1.bf16.msra.mxu0 %v2219
    %2243 = vmatprep.subr.bf16.mxu0 0
    %2244 = vmatpush1.bf16.msra.mxu0 %v2220
    %2245 = vmatprep.subr.bf16.mxu0 0
    %2246 = vmatpush1.bf16.msra.mxu0 0
    %2247 = vmatprep.subr.bf16.mxu0 0
    %2248 = vmatpush1.bf16.msra.mxu0 0
    %2249 = vmatprep.subr.bf16.mxu0 0
    %2250 = vmatpush1.bf16.msra.mxu0 0
    %2251 = vmatprep.subr.bf16.mxu0 0
    %2252 = vmatpush1.bf16.msra.mxu0 0
    %2253 = vmatprep.subr.bf16.mxu0 0
    %2254 = vmatpush1.bf16.msra.mxu0 0
    %2255 = vmatprep.subr.bf16.mxu0 0
    %2256 = vmatpush1.bf16.msra.mxu0 0
    %2257 = vmatprep.subr.bf16.mxu0 0
    %2258 = vmatpush1.bf16.msra.mxu0 0
    %2259 = vmatprep.subr.bf16.mxu0 0
    %2260 = vmatpush1.bf16.msra.mxu0 0
    %2261 = vmatprep.mubr.bf16.mxu0 0
    %2262 = vmatmul.mubr.bf16.gmra.mrb[0].mxu0 %v2157
    %v2263 = vpop.f32.mrb[0].mxu0
    %v2264 = vadd.f32 %v2179, %v2263
    %v2265 = vpop.f32.mrb[0].mxu0
    %v2266 = vpop.f32.mrb[0].mxu0
    %v2267 = vadd.f32 %v2179, %v2266
    %v2268 = vpop.f32.mrb[0].mxu0
    %2269 = vdwg.mxu0
    %v2270 = vmax.f32 %v2264, 0.0
    %v2271 = vmax.f32 %v2267, 0.0
    %v2272 = vpack.c.bf16 %v2271, %v2270
    %v2273 = vld [vmem:[#allocation7] sm:$0xf]
    %v2274 = vld [vmem:[#allocation7 + $0x4] sm:$0xf]
    %v2275 = vld [vmem:[#allocation7 + $0x8] sm:$0xf]
    %v2276 = vld [vmem:[#allocation7 + $0xc] sm:$0xf]
    %v2277 = vld [vmem:[#allocation7 + $0x10] sm:$0xf]
    %v2278 = vld [vmem:[#allocation7 + $0x14] sm:$0xf]
    %v2279 = vld [vmem:[#allocation7 + $0x18] sm:$0xf]
    %v2280 = vld [vmem:[#allocation7 + $0x1c] sm:$0xf]
    %v2281 = vld [vmem:[#allocation7 + $0x20] sm:$0xf]
    %v2282 = vld [vmem:[#allocation7 + $0x24] sm:$0xf]
    %v2283 = vld [vmem:[#allocation7 + $0x28] sm:$0xf]
    %v2284 = vld [vmem:[#allocation7 + $0x2c] sm:$0xf]
    %v2285 = vld [vmem:[#allocation7 + $0x30] sm:$0xf]
    %v2286 = vld [vmem:[#allocation7 + $0x34] sm:$0xf]
    %v2287 = vld [vmem:[#allocation7 + $0x38] sm:$0xf]
    %v2288 = vld [vmem:[#allocation7 + $0x3c] sm:$0xf]
    %v2289 = vld [vmem:[%s12] sm:$0x1]
    %v2291 = vlaneseq
    %v2292 = vshrl.u32 %v2291, 7
    %v2293 = vsub.s32 0, %v2292
    %v2294 = vrot.slane %v2289, %v2293
    %v2312 = vunpack.c.l.b16 %v2273
    %v2313 = vunpack.c.l.b16 %v2274
    %v2314 = vunpack.c.l.b16 %v2275
    %v2315 = vunpack.c.l.b16 %v2276
    %v2316 = vunpack.c.l.b16 %v2277
    %v2317 = vunpack.c.l.b16 %v2278
    %v2318 = vunpack.c.l.b16 %v2279
    %v2319 = vunpack.c.l.b16 %v2280
    %v2320 = vunpack.c.l.b16 %v2281
    %v2321 = vunpack.c.l.b16 %v2282
    %v2322 = vunpack.c.l.b16 %v2283
    %v2323 = vunpack.c.l.b16 %v2284
    %v2324 = vunpack.c.l.b16 %v2285
    %v2325 = vunpack.c.l.b16 %v2286
    %v2326 = vunpack.c.l.b16 %v2287
    %v2327 = vunpack.c.l.b16 %v2288
    %v2328 = vpack.c.b16 %v2313, %v2312
    %v2329 = vpack.c.b16 %v2315, %v2314
    %v2330 = vpack.c.b16 %v2317, %v2316
    %v2331 = vpack.c.b16 %v2319, %v2318
    %v2332 = vpack.c.b16 %v2321, %v2320
    %v2333 = vpack.c.b16 %v2323, %v2322
    %v2334 = vpack.c.b16 %v2325, %v2324
    %v2335 = vpack.c.b16 %v2327, %v2326
    %2344 = vmatprep.subr.bf16.mxu0 0
    %2345 = vmatpush1.bf16.msra.mxu0 %v2328
    %2346 = vmatprep.subr.bf16.mxu0 0
    %2347 = vmatpush1.bf16.msra.mxu0 %v2329
    %2348 = vmatprep.subr.bf16.mxu0 0
    %2349 = vmatpush1.bf16.msra.mxu0 %v2330
    %2350 = vmatprep.subr.bf16.mxu0 0
    %2351 = vmatpush1.bf16.msra.mxu0 %v2331
    %2352 = vmatprep.subr.bf16.mxu0 0
    %2353 = vmatpush1.bf16.msra.mxu0 %v2332
    %2354 = vmatprep.subr.bf16.mxu0 0
    %2355 = vmatpush1.bf16.msra.mxu0 %v2333
    %2356 = vmatprep.subr.bf16.mxu0 0
    %2357 = vmatpush1.bf16.msra.mxu0 %v2334
    %2358 = vmatprep.subr.bf16.mxu0 0
    %2359 = vmatpush1.bf16.msra.mxu0 %v2335
    %2360 = vmatprep.subr.bf16.mxu0 0
    %2361 = vmatpush1.bf16.msra.mxu0 0
    %2362 = vmatprep.subr.bf16.mxu0 0
    %2363 = vmatpush1.bf16.msra.mxu0 0
    %2364 = vmatprep.subr.bf16.mxu0 0
    %2365 = vmatpush1.bf16.msra.mxu0 0
    %2366 = vmatprep.subr.bf16.mxu0 0
    %2367 = vmatpush1.bf16.msra.mxu0 0
    %2368 = vmatprep.subr.bf16.mxu0 0
    %2369 = vmatpush1.bf16.msra.mxu0 0
    %2370 = vmatprep.subr.bf16.mxu0 0
    %2371 = vmatpush1.bf16.msra.mxu0 0
    %2372 = vmatprep.subr.bf16.mxu0 0
    %2373 = vmatpush1.bf16.msra.mxu0 0
    %2374 = vmatprep.subr.bf16.mxu0 0
    %2375 = vmatpush1.bf16.msra.mxu0 0
    %2376 = vmatprep.mubr.bf16.mxu0 0
    %2377 = vmatmul.mubr.bf16.gmra.mrb[0].mxu0 %v2272
    %v2378 = vpop.f32.mrb[0].mxu0
    %v2379 = vadd.f32 %v2294, %v2378
    %v2380 = vpop.f32.mrb[0].mxu0
    %v2381 = vpop.f32.mrb[0].mxu0
    %v2382 = vadd.f32 %v2294, %v2381
    %v2383 = vpop.f32.mrb[0].mxu0
    %2384 = vdwg.mxu0
    %v2385 = vmul.f32 %v2379, 0.5
    %v2386 = vmul.f32 %v2382, 0.5
    %v2387 = vtanh.pop %v2385
    %v2388 = vtanh.pop %v2386
    %v2389 = vadd.f32 %v2387, 1.0
    %v2390 = vadd.f32 %v2388, 1.0
    %v2391 = vmul.f32 %v2389, 0.5
    %v2392 = vmul.f32 %v2390, 0.5
    %2393 = vst [vmem:[%s13] sm:$0xff] %v2391
    %2394 = vst [vmem:[%s13 + $0x8] sm:$0xff] %v2392
    // Predicated region
    $region70: #{hv_classifier_forward.1} parent=1 // pred_check
      _
    $region71: #{hv_classifier_forward.1} parent=1 // pred_check_branch
      %2396 = sbr.rel (0) target = $region73
    $region72: #{hv_classifier_forward.1} parent=1 // pred_region
      _
    $region73: #{hv_classifier_forward.1} parent=1 // pred_fallthru
      _
    // Predicated region
    $region74: #{hv_classifier_forward.1} parent=1 // pred_check
      _
    $region75: #{hv_classifier_forward.1} parent=1 // pred_check_branch
      %2398 = sbr.rel (0) target = $region77
    $region76: #{hv_classifier_forward.1} parent=1 // pred_region
      _
    $region77: #{hv_classifier_forward.1} parent=1 // pred_fallthru
      _
    %2399 = vsyncpa [#allocation3], 1
    %2400 = vsyncpa [#allocation5], 1
    %2401 = vsyncpa [#allocation8], 1

</llo_original>
